<compile_context>
chip_gen: v7x
topology: tpu7x:2x2x1
jax: 0.10.0
libtpu: 0.0.40
codegen_flags: <defaults>
</compile_context>

<pallas_src>
import functools

import jax
import jax.numpy as jnp
from jax import lax
from jax.experimental import pallas as pl
from jax.experimental.pallas import tpu as pltpu


def _round_up(x, m):
  return -(-x // m) * m


# ----------------------------- Pallas kernel -----------------------------

def _w2v_decoder_kernel(x_ref, m_ref, *refs, n_layers, kernel_size,
                        dilation_rate, max_pad, fuse_gates):
  """Whole W2VDecoder forward for one batch element.

  refs = (weights..., o_ref, pad_scr, out_scr). The weight layout depends on
  `fuse_gates` (True when H % 128 == 0: gate and res/skip matmuls fused for the
  256-wide MXU, outputs sliced at free 128-lane boundaries).
  """
  o_ref, pad_scr, out_scr = refs[-3], refs[-2], refs[-1]
  if fuse_gates:
    (wpre_ref, bpre_ref, win_ref, bin_ref, wrs_ref, bres_ref,
     wskip_last_ref, bskip_sum_ref, wproj_ref, bproj_ref) = refs[:-3]
  else:
    (wpre_ref, bpre_ref, wt_ref, bt_ref, ws_ref, bs_ref, wres_ref, bres_ref,
     wskip_ref, bskip_sum_ref, wproj_ref, bproj_ref) = refs[:-3]

  T = x_ref.shape[1]
  H = out_scr.shape[1]

  mask_t1 = m_ref[0]                                     # (T, 1) f32
  # hoisted once; JAX does not CSE broadcast_in_dim, so reuse in every layer
  mask_h = jnp.broadcast_to(mask_t1, (T, H))             # (T, H) f32

  # pre: Conv1d(in_channels, hidden, 1) -> (x * mask) @ Wpre + b, then * mask
  x = (x_ref[0] * mask_t1).astype(jnp.bfloat16)          # (T, Cin)
  h = (jnp.dot(x, wpre_ref[...], preferred_element_type=jnp.float32)
       + bpre_ref[...]) * mask_h                         # (T, H) f32

  # The hidden state lives in the CENTER of the zero-halo conv buffer; the halos are
  # zeroed exactly once (masked residual updates never touch them).
  pad_scr[0:max_pad, :] = jnp.zeros((max_pad, H), jnp.float32)
  pad_scr[max_pad + T:, :] = jnp.zeros((max_pad, H), jnp.float32)
  pad_scr[max_pad:max_pad + T, :] = h
  out_scr[...] = jnp.zeros_like(out_scr)

  center = (kernel_size - 1) // 2
  for i in range(n_layers):
    dil = dilation_rate ** i

    # Gather the K dilated taps into one (T, K*H) slab -> fused matmul(s).
    taps = [pad_scr[max_pad + (k - center) * dil:
                    max_pad + (k - center) * dil + T, :]
            for k in range(kernel_size)]
    slab = jnp.concatenate(taps, axis=-1).astype(jnp.bfloat16)     # (T, K*H)

    # in_layers[i]: dilated Conv1d(H, 2H, K)
    if fuse_gates:
      gates = (jnp.dot(slab, win_ref[i], preferred_element_type=jnp.float32)
               + bin_ref[i:i + 1, :])                              # (T, 2H)
      xt, xs = gates[:, :H], gates[:, H:]                          # free vreg slices
    else:
      xt = (jnp.dot(slab, wt_ref[i], preferred_element_type=jnp.float32)
            + bt_ref[i:i + 1, :])                                  # (T, H)
      xs = (jnp.dot(slab, ws_ref[i], preferred_element_type=jnp.float32)
            + bs_ref[i:i + 1, :])                                  # (T, H)

    # fused_add_tanh_sigmoid_multiply with g=None; dropout(p=0) is identity
    acts = (jnp.tanh(xt) * jax.nn.sigmoid(xs)).astype(jnp.bfloat16)  # (T, H)

    # res_skip_layers[i]: 1x1 conv. Skip biases are hoisted out of the loop, so the
    # out_scr accumulation chain below is a pure matmul-accumulate.
    if i < n_layers - 1:
      if fuse_gates:
        rs = jnp.dot(acts, wrs_ref[i], preferred_element_type=jnp.float32)  # (T, 2H)
        res = rs[:, :H] + bres_ref[i:i + 1, :]
        out_scr[...] = out_scr[...] + rs[:, H:]
      else:
        out_scr[...] = out_scr[...] + jnp.dot(
            acts, wskip_ref[i], preferred_element_type=jnp.float32)
        res = (jnp.dot(acts, wres_ref[i], preferred_element_type=jnp.float32)
               + bres_ref[i:i + 1, :])
      # re-read the center slice right before the residual write (short live range)
      h_old = pad_scr[max_pad:max_pad + T, :]
      pad_scr[max_pad:max_pad + T, :] = (h_old + res) * mask_h
    else:
      w_last = wskip_last_ref[...] if fuse_gates else wskip_ref[i]
      out_scr[...] = out_scr[...] + jnp.dot(
          acts, w_last, preferred_element_type=jnp.float32)

  # hoisted skip biases added exactly once; WN returns output * mask
  out = ((out_scr[...] + bskip_sum_ref[...]) * mask_h).astype(jnp.bfloat16)
  # proj: Conv1d(hidden, output_size, 1) on lane-dense padded output, then * mask
  y = (jnp.dot(out, wproj_ref[...], preferred_element_type=jnp.float32)
       + bproj_ref[...]) * mask_t1
  o_ref[0] = y.astype(jnp.bfloat16)                      # bf16 writeback


def w2v_decoder_pallas(x_btc, mask_bt1, kernel_params, *, kernel_size,
                       dilation_rate, n_layers, output_size):
  weights = kernel_params
  B, T0, Cin = x_btc.shape
  H = weights[0].shape[1]                 # wpre: (Cin, H)
  fuse_gates = (H % 128 == 0)
  Cout_pad = weights[-2].shape[1]         # wproj: (H, Cout_pad)

  # pad T to a multiple of 16 (sublane-aligned f32 tiles, native bf16 output tiles)
  T = max(16, _round_up(T0, 16))
  if T != T0:
    x_btc = jnp.pad(x_btc, ((0, 0), (0, T - T0), (0, 0)))
    mask_bt1 = jnp.pad(mask_bt1, ((0, 0), (0, T - T0), (0, 0)))

  # halo = the single largest per-layer dilation padding (the minimum needed)
  raw_pad = dilation_rate ** (n_layers - 1) * (kernel_size - 1) // 2
  max_pad = max(8, _round_up(raw_pad, 8))   # sublane-aligned halo

  kernel = functools.partial(
      _w2v_decoder_kernel, n_layers=n_layers, kernel_size=kernel_size,
      dilation_rate=dilation_rate, max_pad=max_pad, fuse_gates=fuse_gates)

  # Grid-invariant weights: whole array resident in VMEM (no per-step double buffering).
  wspec = pl.BlockSpec(memory_space=pltpu.MemorySpace.VMEM)

  # per-generation VMEM budget: weights + scratch + double-buffered per-step I/O blocks
  def nbytes(a):
    return int(a.size) * a.dtype.itemsize
  scratch_bytes = (T + 2 * max_pad) * H * 4 + T * H * 4
  io_bytes = 2 * (T * Cin * 4 + T * 4 + T * Cout_pad * 2)
  need = sum(nbytes(w) for w in weights) + scratch_bytes + io_bytes
  try:
    vmem_cap = pltpu.get_tpu_info().vmem_capacity_bytes
  except Exception:
    vmem_cap = 64 * 1024 * 1024
  vmem_limit = int(min(max(2 * need, 32 * 1024 * 1024), int(0.9 * vmem_cap)))

  y = pl.pallas_call(
      kernel,
      out_shape=jax.ShapeDtypeStruct((B, T, Cout_pad), jnp.bfloat16),
      grid=(B,),                          # keep >=2 so both v7x TCs get work
      in_specs=[pl.BlockSpec((1, T, Cin), lambda b: (b, 0, 0)),
                pl.BlockSpec((1, T, 1), lambda b: (b, 0, 0))]
               + [wspec] * len(weights),
      out_specs=pl.BlockSpec((1, T, Cout_pad), lambda b: (b, 0, 0)),
      scratch_shapes=[
          pltpu.VMEM((T + 2 * max_pad, H), jnp.float32),  # zero-halo hidden buffer
          pltpu.VMEM((T, H), jnp.float32),                # skip accumulator
      ],
      compiler_params=pltpu.CompilerParams(
          dimension_semantics=("parallel",),
          vmem_limit_bytes=vmem_limit),
  )(x_btc, mask_bt1, *weights)

  return y[:, :T0, :output_size].astype(jnp.float32)


# ----------------------------- pure-JAX reference -----------------------------

def _conv1d_ref(x_btc, w_oik, b_o, dilation=1, padding=0):
  # x: (B, T, Cin); w: (Cout, Cin, K) in PyTorch layout; b: (Cout,)
  out = lax.conv_general_dilated(
      x_btc, jnp.transpose(w_oik, (2, 1, 0)),
      window_strides=(1,), padding=[(padding, padding)],
      rhs_dilation=(dilation,),
      dimension_numbers=("NWC", "WIO", "NWC"))
  return out + b_o[None, None, :]


def w2v_decoder_ref(x_btc, mask_bt1, tw, *, kernel_size, dilation_rate,
                    n_layers, hidden):
  h = _conv1d_ref(x_btc * mask_bt1, tw["pre_w"], tw["pre_b"]) * mask_bt1
  output = jnp.zeros_like(h)
  for i in range(n_layers):
    dil = dilation_rate ** i
    pad = (kernel_size * dil - dil) // 2
    x_in = _conv1d_ref(h, tw["in_w"][i], tw["in_b"][i], dilation=dil, padding=pad)
    acts = jnp.tanh(x_in[..., :hidden]) * jax.nn.sigmoid(x_in[..., hidden:])
    rs = _conv1d_ref(acts, tw["rs_w"][i], tw["rs_b"][i])
    if i < n_layers - 1:
      h = (h + rs[..., :hidden]) * mask_bt1
      output = output + rs[..., hidden:]
    else:
      output = output + rs
  output = output * mask_bt1
  return _conv1d_ref(output, tw["proj_w"], tw["proj_b"]) * mask_bt1


# ----------------------------- parameter setup -----------------------------

def make_params(key, *, in_channels, hidden, kernel_size, n_layers, output_size):
  keys = jax.random.split(key, 4 + 4 * n_layers)
  ki = iter(keys)
  H = hidden

  def rnd(k, shape):
    # Canonical weights are bf16-representable values (kernel stores them in bf16,
    # the f32 reference uses the identical values upcast to f32).
    w = jax.random.normal(k, shape, jnp.float32) * 0.1
    return w.astype(jnp.bfloat16).astype(jnp.float32)

  tw = {
      "pre_w": rnd(next(ki), (H, in_channels, 1)),
      "pre_b": rnd(next(ki), (H,)),
      "in_w": [], "in_b": [], "rs_w": [], "rs_b": [],
      "proj_w": rnd(next(ki), (output_size, H, 1)),
      "proj_b": rnd(next(ki), (output_size,)),
  }
  for i in range(n_layers):
    tw["in_w"].append(rnd(next(ki), (2 * H, H, kernel_size)))
    tw["in_b"].append(rnd(next(ki), (2 * H,)))
    rs_out = 2 * H if i < n_layers - 1 else H
    tw["rs_w"].append(rnd(next(ki), (rs_out, H, 1)))
    tw["rs_b"].append(rnd(next(ki), (rs_out,)))

  # ----- kernel-layout weights -----
  fuse_gates = (H % 128 == 0)

  wpre = tw["pre_w"][:, :, 0].T.astype(jnp.bfloat16)       # (Cin, H)
  bpre = tw["pre_b"][None, :]                              # (1, H) f32

  # dilated in_layers: fuse the K taps along the contraction dim; columns are
  # [tanh-half | sigmoid-half]
  win_l = [jnp.transpose(tw["in_w"][i], (2, 1, 0)).reshape(kernel_size * H, 2 * H)
           for i in range(n_layers)]
  bin_l = [tw["in_b"][i] for i in range(n_layers)]

  # res_skip 1x1 convs: columns are [res | skip]; last layer is skip-only.
  # Skip biases are hoisted into a single summed bias added once after the loop.
  bskip_sum = jnp.zeros((H,), jnp.float32)
  wrs_l, bres_l = [], []
  for i in range(n_layers - 1):
    w = tw["rs_w"][i][:, :, 0].T                           # (H, 2H)
    wrs_l.append(w)
    bres_l.append(tw["rs_b"][i][:H])
    bskip_sum = bskip_sum + tw["rs_b"][i][H:]
  wskip_last = tw["rs_w"][n_layers - 1][:, :, 0].T         # (H, H)
  bskip_sum = (bskip_sum + tw["rs_b"][n_layers - 1])[None, :]   # (1, H)

  # proj 1x1 conv, output channels padded to a lane-dense multiple of 128
  cout_pad = _round_up(output_size, 128)
  wproj = jnp.zeros((H, cout_pad), jnp.float32).at[:, :output_size].set(
      tw["proj_w"][:, :, 0].T).astype(jnp.bfloat16)        # (H, Cout_pad)
  bproj = jnp.zeros((1, cout_pad), jnp.float32).at[0, :output_size].set(
      tw["proj_b"])                                        # (1, Cout_pad)

  if fuse_gates:
    win = jnp.stack(win_l).astype(jnp.bfloat16)            # (L, K*H, 2H)
    bin_ = jnp.stack(bin_l)                                # (L, 2H) f32
    if n_layers > 1:
      wrs = jnp.stack(wrs_l).astype(jnp.bfloat16)          # (L-1, H, 2H)
      bres = jnp.stack(bres_l)                             # (L-1, H) f32
    else:
      wrs = jnp.zeros((1, H, 2 * H), jnp.bfloat16)
      bres = jnp.zeros((1, H), jnp.float32)
    kernel_params = (wpre, bpre, win, bin_, wrs, bres,
                     wskip_last.astype(jnp.bfloat16), bskip_sum, wproj, bproj)
  else:
    wt = jnp.stack([w[:, :H] for w in win_l]).astype(jnp.bfloat16)   # (L, K*H, H)
    ws = jnp.stack([w[:, H:] for w in win_l]).astype(jnp.bfloat16)   # (L, K*H, H)
    bt = jnp.stack([b[:H] for b in bin_l])                           # (L, H) f32
    bs = jnp.stack([b[H:] for b in bin_l])                           # (L, H) f32
    if n_layers > 1:
      wres = jnp.stack([w[:, :H] for w in wrs_l]).astype(jnp.bfloat16)  # (L-1, H, H)
      bres = jnp.stack(bres_l)                                          # (L-1, H)
      wskip = jnp.stack([w[:, H:] for w in wrs_l]
                        + [wskip_last]).astype(jnp.bfloat16)            # (L, H, H)
    else:
      wres = jnp.zeros((1, H, H), jnp.bfloat16)
      bres = jnp.zeros((1, H), jnp.float32)
      wskip = wskip_last[None].astype(jnp.bfloat16)
    kernel_params = (wpre, bpre, wt, bt, ws, bs, wres, bres, wskip,
                     bskip_sum, wproj, bproj)
  return tw, kernel_params


# ----------------------------- main -----------------------------

if __name__ == "__main__":
  def run_case(name, *, B, T, in_channels, hidden, kernel_size, dilation_rate,
               n_layers, output_size, seed):
    key = jax.random.PRNGKey(seed)
    k_x, k_p = jax.random.split(key)

    # x in PyTorch layout (B, C, T); x_mask in (B, 1, T)
    x_nct = jax.random.normal(k_x, (B, in_channels, T), jnp.float32)
    lengths = jnp.array([T] + [max(T - 4, 1)] * (B - 1), jnp.int32)
    x_mask_n1t = (jnp.arange(T)[None, None, :] <
                  lengths[:, None, None]).astype(jnp.float32)

    tw, kernel_params = make_params(
        k_p, in_channels=in_channels, hidden=hidden, kernel_size=kernel_size,
        n_layers=n_layers, output_size=output_size)

    # convert to the kernel's time-major layout
    x_btc = jnp.transpose(x_nct, (0, 2, 1))             # (B, T, Cin)
    mask_bt1 = jnp.transpose(x_mask_n1t, (0, 2, 1))     # (B, T, 1)

    y = w2v_decoder_pallas(
        x_btc, mask_bt1, kernel_params,
        kernel_size=kernel_size, dilation_rate=dilation_rate,
        n_layers=n_layers, output_size=output_size)
    y = jax.block_until_ready(y)

    y_ref = w2v_decoder_ref(
        x_btc, mask_bt1, tw,
        kernel_size=kernel_size, dilation_rate=dilation_rate,
        n_layers=n_layers, hidden=hidden)

    assert y.shape == (B, T, output_size), (name, y.shape)
    # bf16 matmul operands / bf16 output vs full-f32 reference
    err = float(jnp.max(jnp.abs(y - y_ref)))
    assert jnp.allclose(y, y_ref, atol=3e-2, rtol=3e-2), (name, err)

  # small config (H < 128): split-gate path
  run_case("split", B=2, T=16, in_channels=8, hidden=32, kernel_size=3,
           dilation_rate=2, n_layers=4, output_size=64, seed=0)
  # H % 128 == 0 config: fused (T,K*H)@(K*H,2H) gate and (H,2H) res/skip matmuls
  run_case("fused", B=2, T=16, in_channels=8, hidden=128, kernel_size=3,
           dilation_rate=2, n_layers=3, output_size=64, seed=1)

  print("KERNEL_OK")
</pallas_src>

<mosaic_0001>
module attributes {stable_mosaic.version = 11 : i64} {
  func.func @_w2v_decoder_kernel(%arg0: i32, %arg1: memref<1x16x8xf32, #tpu.memory_space<vmem>>, %arg2: memref<1x16x1xf32, #tpu.memory_space<vmem>>, %arg3: memref<8x32xbf16, #tpu.memory_space<vmem>>, %arg4: memref<1x32xf32, #tpu.memory_space<vmem>>, %arg5: memref<4x96x32xbf16, #tpu.memory_space<vmem>>, %arg6: memref<4x32xf32, #tpu.memory_space<vmem>>, %arg7: memref<4x96x32xbf16, #tpu.memory_space<vmem>>, %arg8: memref<4x32xf32, #tpu.memory_space<vmem>>, %arg9: memref<3x32x32xbf16, #tpu.memory_space<vmem>>, %arg10: memref<3x32xf32, #tpu.memory_space<vmem>>, %arg11: memref<4x32x32xbf16, #tpu.memory_space<vmem>>, %arg12: memref<1x32xf32, #tpu.memory_space<vmem>>, %arg13: memref<32x128xbf16, #tpu.memory_space<vmem>>, %arg14: memref<1x128xf32, #tpu.memory_space<vmem>>, %arg15: memref<1x16x128xbf16, #tpu.memory_space<vmem>>, %arg16: memref<32x32xf32, #tpu.memory_space<vmem>>, %arg17: memref<16x32xf32, #tpu.memory_space<vmem>>) attributes {dimension_semantics = [#tpu.dimension_semantics<parallel>], iteration_bounds = array<i64: 2>, scalar_prefetch = 0 : i64, scratch_operands = 2 : i64, tpu.core_type = #tpu.core_type<tc>, window_params = [{transform_indices = @transform_0, window_bounds = array<i64: 1, 16, 8>}, {transform_indices = @transform_1, window_bounds = array<i64: 1, 16, 1>}, {pipeline_mode = #tpu.pipeline_mode<synchronous>, transform_indices = @transform_2, window_bounds = array<i64: 8, 32>}, {pipeline_mode = #tpu.pipeline_mode<synchronous>, transform_indices = @transform_3, window_bounds = array<i64: 1, 32>}, {pipeline_mode = #tpu.pipeline_mode<synchronous>, transform_indices = @transform_4, window_bounds = array<i64: 4, 96, 32>}, {pipeline_mode = #tpu.pipeline_mode<synchronous>, transform_indices = @transform_5, window_bounds = array<i64: 4, 32>}, {pipeline_mode = #tpu.pipeline_mode<synchronous>, transform_indices = @transform_6, window_bounds = array<i64: 4, 96, 32>}, {pipeline_mode = #tpu.pipeline_mode<synchronous>, transform_indices = @transform_7, window_bounds = array<i64: 4, 32>}, {pipeline_mode = #tpu.pipeline_mode<synchronous>, transform_indices = @transform_8, window_bounds = array<i64: 3, 32, 32>}, {pipeline_mode = #tpu.pipeline_mode<synchronous>, transform_indices = @transform_9, window_bounds = array<i64: 3, 32>}, {pipeline_mode = #tpu.pipeline_mode<synchronous>, transform_indices = @transform_10, window_bounds = array<i64: 4, 32, 32>}, {pipeline_mode = #tpu.pipeline_mode<synchronous>, transform_indices = @transform_11, window_bounds = array<i64: 1, 32>}, {pipeline_mode = #tpu.pipeline_mode<synchronous>, transform_indices = @transform_12, window_bounds = array<i64: 32, 128>}, {pipeline_mode = #tpu.pipeline_mode<synchronous>, transform_indices = @transform_13, window_bounds = array<i64: 1, 128>}, {transform_indices = @transform_14, window_bounds = array<i64: 1, 16, 128>}]} {
    %c0 = arith.constant 0 : index
    %c0_0 = arith.constant 0 : index
    %c0_1 = arith.constant 0 : index
    %0 = vector.load %arg2[%c0, %c0_0, %c0_1] : memref<1x16x1xf32, #tpu.memory_space<vmem>>, vector<1x16x1xf32>
    %1 = vector.shape_cast %0 : vector<1x16x1xf32> to vector<16x1xf32>
    %2 = vector.shape_cast %1 : vector<16x1xf32> to vector<16x1xf32>
    %3 = vector.broadcast %2 : vector<16x1xf32> to vector<16x32xf32>
    %c0_2 = arith.constant 0 : index
    %c0_3 = arith.constant 0 : index
    %c0_4 = arith.constant 0 : index
    %4 = vector.load %arg1[%c0_2, %c0_3, %c0_4] : memref<1x16x8xf32, #tpu.memory_space<vmem>>, vector<1x16x8xf32>
    %5 = vector.shape_cast %4 : vector<1x16x8xf32> to vector<16x8xf32>
    %6 = vector.broadcast %1 : vector<16x1xf32> to vector<16x8xf32>
    %7 = arith.mulf %5, %6 : vector<16x8xf32>
    %8 = arith.truncf %7 : vector<16x8xf32> to vector<16x8xbf16>
    %c0_5 = arith.constant 0 : index
    %c0_6 = arith.constant 0 : index
    %9 = vector.load %arg3[%c0_5, %c0_6] : memref<8x32xbf16, #tpu.memory_space<vmem>>, vector<8x32xbf16>
    %cst = arith.constant dense<0.000000e+00> : vector<16x32xf32>
    %10 = tpu.matmul %8, %9, %cst {dimension_numbers = #tpu.dot_dimension_numbers<[1], [0], [0], [1], [0, 0, 1, 1], [], []>} : vector<16x8xbf16>, vector<8x32xbf16>, vector<16x32xf32> -> vector<16x32xf32>
    %c0_7 = arith.constant 0 : index
    %c0_8 = arith.constant 0 : index
    %11 = vector.load %arg4[%c0_7, %c0_8] : memref<1x32xf32, #tpu.memory_space<vmem>>, vector<1x32xf32>
    %12 = vector.broadcast %11 : vector<1x32xf32> to vector<16x32xf32>
    %13 = arith.addf %10, %12 : vector<16x32xf32>
    %14 = arith.mulf %13, %3 : vector<16x32xf32>
    %cst_9 = arith.constant 0.000000e+00 : f32
    %15 = vector.broadcast %cst_9 : f32 to vector<8x32xf32>
    %c0_10 = arith.constant 0 : index
    %c0_11 = arith.constant 0 : index
    %16 = vector.load %arg16[%c0_10, %c0_11] : memref<32x32xf32, #tpu.memory_space<vmem>>, vector<8x32xf32>
    tpu.vector_store %arg16[%c0_10, %c0_11], %15 {strides = array<i32>} : memref<32x32xf32, #tpu.memory_space<vmem>>, vector<8x32xf32>,
    %cst_12 = arith.constant 0.000000e+00 : f32
    %17 = vector.broadcast %cst_12 : f32 to vector<8x32xf32>
    %c24 = arith.constant 24 : index
    %c0_13 = arith.constant 0 : index
    %18 = vector.load %arg16[%c24, %c0_13] : memref<32x32xf32, #tpu.memory_space<vmem>>, vector<8x32xf32>
    tpu.vector_store %arg16[%c24, %c0_13], %17 {strides = array<i32>} : memref<32x32xf32, #tpu.memory_space<vmem>>, vector<8x32xf32>,
    %c8 = arith.constant 8 : index
    %c0_14 = arith.constant 0 : index
    %19 = vector.load %arg16[%c8, %c0_14] : memref<32x32xf32, #tpu.memory_space<vmem>>, vector<16x32xf32>
    tpu.vector_store %arg16[%c8, %c0_14], %14 {strides = array<i32>} : memref<32x32xf32, #tpu.memory_space<vmem>>, vector<16x32xf32>,
    %cst_15 = arith.constant 0.000000e+00 : f32
    %20 = vector.broadcast %cst_15 : f32 to vector<16x32xf32>
    %c0_16 = arith.constant 0 : index
    %c0_17 = arith.constant 0 : index
    %21 = vector.load %arg17[%c0_16, %c0_17] : memref<16x32xf32, #tpu.memory_space<vmem>>, vector<16x32xf32>
    tpu.vector_store %arg17[%c0_16, %c0_17], %20 {strides = array<i32>} : memref<16x32xf32, #tpu.memory_space<vmem>>, vector<16x32xf32>,
    %c7 = arith.constant 7 : index
    %c0_18 = arith.constant 0 : index
    %22 = vector.load %arg16[%c7, %c0_18] : memref<32x32xf32, #tpu.memory_space<vmem>>, vector<16x32xf32>
    %c8_19 = arith.constant 8 : index
    %c0_20 = arith.constant 0 : index
    %23 = vector.load %arg16[%c8_19, %c0_20] : memref<32x32xf32, #tpu.memory_space<vmem>>, vector<16x32xf32>
    %c9 = arith.constant 9 : index
    %c0_21 = arith.constant 0 : index
    %24 = vector.load %arg16[%c9, %c0_21] : memref<32x32xf32, #tpu.memory_space<vmem>>, vector<16x32xf32>
    %25 = tpu.concatenate %22, %23, %24 in 1 : vector<16x32xf32>, vector<16x32xf32>, vector<16x32xf32> -> vector<16x96xf32>
    %26 = arith.truncf %25 : vector<16x96xf32> to vector<16x96xbf16>
    %c0_22 = arith.constant 0 : index
    %c0_23 = arith.constant 0 : index
    %c0_24 = arith.constant 0 : index
    %27 = vector.load %arg5[%c0_22, %c0_23, %c0_24] : memref<4x96x32xbf16, #tpu.memory_space<vmem>>, vector<1x96x32xbf16>
    %28 = vector.shape_cast %27 : vector<1x96x32xbf16> to vector<96x32xbf16>
    %cst_25 = arith.constant dense<0.000000e+00> : vector<16x32xf32>
    %29 = tpu.matmul %26, %28, %cst_25 {dimension_numbers = #tpu.dot_dimension_numbers<[1], [0], [0], [1], [0, 0, 1, 1], [], []>} : vector<16x96xbf16>, vector<96x32xbf16>, vector<16x32xf32> -> vector<16x32xf32>
    %c0_26 = arith.constant 0 : index
    %c0_27 = arith.constant 0 : index
    %30 = vector.load %arg6[%c0_26, %c0_27] : memref<4x32xf32, #tpu.memory_space<vmem>>, vector<1x32xf32>
    %31 = vector.broadcast %30 : vector<1x32xf32> to vector<16x32xf32>
    %32 = arith.addf %29, %31 : vector<16x32xf32>
    %c0_28 = arith.constant 0 : index
    %c0_29 = arith.constant 0 : index
    %c0_30 = arith.constant 0 : index
    %33 = vector.load %arg7[%c0_28, %c0_29, %c0_30] : memref<4x96x32xbf16, #tpu.memory_space<vmem>>, vector<1x96x32xbf16>
    %34 = vector.shape_cast %33 : vector<1x96x32xbf16> to vector<96x32xbf16>
    %cst_31 = arith.constant dense<0.000000e+00> : vector<16x32xf32>
    %35 = tpu.matmul %26, %34, %cst_31 {dimension_numbers = #tpu.dot_dimension_numbers<[1], [0], [0], [1], [0, 0, 1, 1], [], []>} : vector<16x96xbf16>, vector<96x32xbf16>, vector<16x32xf32> -> vector<16x32xf32>
    %c0_32 = arith.constant 0 : index
    %c0_33 = arith.constant 0 : index
    %36 = vector.load %arg8[%c0_32, %c0_33] : memref<4x32xf32, #tpu.memory_space<vmem>>, vector<1x32xf32>
    %37 = vector.broadcast %36 : vector<1x32xf32> to vector<16x32xf32>
    %38 = arith.addf %35, %37 : vector<16x32xf32>
    %39 = math.tanh %32 : vector<16x32xf32>
    %40 = arith.negf %38 : vector<16x32xf32>
    %41 = math.exp %40 : vector<16x32xf32>
    %cst_34 = arith.constant 1.000000e+00 : f32
    %42 = vector.broadcast %cst_34 : f32 to vector<16x32xf32>
    %43 = arith.addf %42, %41 : vector<16x32xf32>
    %44 = arith.divf %42, %43 : vector<16x32xf32>
    %45 = arith.mulf %39, %44 : vector<16x32xf32>
    %46 = arith.truncf %45 : vector<16x32xf32> to vector<16x32xbf16>
    %c0_35 = arith.constant 0 : index
    %c0_36 = arith.constant 0 : index
    %47 = vector.load %arg17[%c0_35, %c0_36] : memref<16x32xf32, #tpu.memory_space<vmem>>, vector<16x32xf32>
    %c0_37 = arith.constant 0 : index
    %c0_38 = arith.constant 0 : index
    %c0_39 = arith.constant 0 : index
    %48 = vector.load %arg11[%c0_37, %c0_38, %c0_39] : memref<4x32x32xbf16, #tpu.memory_space<vmem>>, vector<1x32x32xbf16>
    %49 = vector.shape_cast %48 : vector<1x32x32xbf16> to vector<32x32xbf16>
    %cst_40 = arith.constant dense<0.000000e+00> : vector<16x32xf32>
    %50 = tpu.matmul %46, %49, %cst_40 {dimension_numbers = #tpu.dot_dimension_numbers<[1], [0], [0], [1], [0, 0, 1, 1], [], []>} : vector<16x32xbf16>, vector<32x32xbf16>, vector<16x32xf32> -> vector<16x32xf32>
    %51 = arith.addf %47, %50 : vector<16x32xf32>
    %c0_41 = arith.constant 0 : index
    %c0_42 = arith.constant 0 : index
    %52 = vector.load %arg17[%c0_41, %c0_42] : memref<16x32xf32, #tpu.memory_space<vmem>>, vector<16x32xf32>
    tpu.vector_store %arg17[%c0_41, %c0_42], %51 {strides = array<i32>} : memref<16x32xf32, #tpu.memory_space<vmem>>, vector<16x32xf32>,
    %c0_43 = arith.constant 0 : index
    %c0_44 = arith.constant 0 : index
    %c0_45 = arith.constant 0 : index
    %53 = vector.load %arg9[%c0_43, %c0_44, %c0_45] : memref<3x32x32xbf16, #tpu.memory_space<vmem>>, vector<1x32x32xbf16>
    %54 = vector.shape_cast %53 : vector<1x32x32xbf16> to vector<32x32xbf16>
    %cst_46 = arith.constant dense<0.000000e+00> : vector<16x32xf32>
    %55 = tpu.matmul %46, %54, %cst_46 {dimension_numbers = #tpu.dot_dimension_numbers<[1], [0], [0], [1], [0, 0, 1, 1], [], []>} : vector<16x32xbf16>, vector<32x32xbf16>, vector<16x32xf32> -> vector<16x32xf32>
    %c0_47 = arith.constant 0 : index
    %c0_48 = arith.constant 0 : index
    %56 = vector.load %arg10[%c0_47, %c0_48] : memref<3x32xf32, #tpu.memory_space<vmem>>, vector<1x32xf32>
    %57 = vector.broadcast %56 : vector<1x32xf32> to vector<16x32xf32>
    %58 = arith.addf %55, %57 : vector<16x32xf32>
    %c8_49 = arith.constant 8 : index
    %c0_50 = arith.constant 0 : index
    %59 = vector.load %arg16[%c8_49, %c0_50] : memref<32x32xf32, #tpu.memory_space<vmem>>, vector<16x32xf32>
    %60 = arith.addf %59, %58 : vector<16x32xf32>
    %61 = arith.mulf %60, %3 : vector<16x32xf32>
    %c8_51 = arith.constant 8 : index
    %c0_52 = arith.constant 0 : index
    %62 = vector.load %arg16[%c8_51, %c0_52] : memref<32x32xf32, #tpu.memory_space<vmem>>, vector<16x32xf32>
    tpu.vector_store %arg16[%c8_51, %c0_52], %61 {strides = array<i32>} : memref<32x32xf32, #tpu.memory_space<vmem>>, vector<16x32xf32>,
    %c6 = arith.constant 6 : index
    %c0_53 = arith.constant 0 : index
    %63 = vector.load %arg16[%c6, %c0_53] : memref<32x32xf32, #tpu.memory_space<vmem>>, vector<16x32xf32>
    %c8_54 = arith.constant 8 : index
    %c0_55 = arith.constant 0 : index
    %64 = vector.load %arg16[%c8_54, %c0_55] : memref<32x32xf32, #tpu.memory_space<vmem>>, vector<16x32xf32>
    %c10 = arith.constant 10 : index
    %c0_56 = arith.constant 0 : index
    %65 = vector.load %arg16[%c10, %c0_56] : memref<32x32xf32, #tpu.memory_space<vmem>>, vector<16x32xf32>
    %66 = tpu.concatenate %63, %64, %65 in 1 : vector<16x32xf32>, vector<16x32xf32>, vector<16x32xf32> -> vector<16x96xf32>
    %67 = arith.truncf %66 : vector<16x96xf32> to vector<16x96xbf16>
    %c1 = arith.constant 1 : index
    %c0_57 = arith.constant 0 : index
    %c0_58 = arith.constant 0 : index
    %68 = vector.load %arg5[%c1, %c0_57, %c0_58] : memref<4x96x32xbf16, #tpu.memory_space<vmem>>, vector<1x96x32xbf16>
    %69 = vector.shape_cast %68 : vector<1x96x32xbf16> to vector<96x32xbf16>
    %cst_59 = arith.constant dense<0.000000e+00> : vector<16x32xf32>
    %70 = tpu.matmul %67, %69, %cst_59 {dimension_numbers = #tpu.dot_dimension_numbers<[1], [0], [0], [1], [0, 0, 1, 1], [], []>} : vector<16x96xbf16>, vector<96x32xbf16>, vector<16x32xf32> -> vector<16x32xf32>
    %c1_60 = arith.constant 1 : index
    %c0_61 = arith.constant 0 : index
    %71 = vector.load %arg6[%c1_60, %c0_61] : memref<4x32xf32, #tpu.memory_space<vmem>>, vector<1x32xf32>
    %72 = vector.broadcast %71 : vector<1x32xf32> to vector<16x32xf32>
    %73 = arith.addf %70, %72 : vector<16x32xf32>
    %c1_62 = arith.constant 1 : index
    %c0_63 = arith.constant 0 : index
    %c0_64 = arith.constant 0 : index
    %74 = vector.load %arg7[%c1_62, %c0_63, %c0_64] : memref<4x96x32xbf16, #tpu.memory_space<vmem>>, vector<1x96x32xbf16>
    %75 = vector.shape_cast %74 : vector<1x96x32xbf16> to vector<96x32xbf16>
    %cst_65 = arith.constant dense<0.000000e+00> : vector<16x32xf32>
    %76 = tpu.matmul %67, %75, %cst_65 {dimension_numbers = #tpu.dot_dimension_numbers<[1], [0], [0], [1], [0, 0, 1, 1], [], []>} : vector<16x96xbf16>, vector<96x32xbf16>, vector<16x32xf32> -> vector<16x32xf32>
    %c1_66 = arith.constant 1 : index
    %c0_67 = arith.constant 0 : index
    %77 = vector.load %arg8[%c1_66, %c0_67] : memref<4x32xf32, #tpu.memory_space<vmem>>, vector<1x32xf32>
    %78 = vector.broadcast %77 : vector<1x32xf32> to vector<16x32xf32>
    %79 = arith.addf %76, %78 : vector<16x32xf32>
    %80 = math.tanh %73 : vector<16x32xf32>
    %81 = arith.negf %79 : vector<16x32xf32>
    %82 = math.exp %81 : vector<16x32xf32>
    %cst_68 = arith.constant 1.000000e+00 : f32
    %83 = vector.broadcast %cst_68 : f32 to vector<16x32xf32>
    %84 = arith.addf %83, %82 : vector<16x32xf32>
    %85 = arith.divf %83, %84 : vector<16x32xf32>
    %86 = arith.mulf %80, %85 : vector<16x32xf32>
    %87 = arith.truncf %86 : vector<16x32xf32> to vector<16x32xbf16>
    %c0_69 = arith.constant 0 : index
    %c0_70 = arith.constant 0 : index
    %88 = vector.load %arg17[%c0_69, %c0_70] : memref<16x32xf32, #tpu.memory_space<vmem>>, vector<16x32xf32>
    %c1_71 = arith.constant 1 : index
    %c0_72 = arith.constant 0 : index
    %c0_73 = arith.constant 0 : index
    %89 = vector.load %arg11[%c1_71, %c0_72, %c0_73] : memref<4x32x32xbf16, #tpu.memory_space<vmem>>, vector<1x32x32xbf16>
    %90 = vector.shape_cast %89 : vector<1x32x32xbf16> to vector<32x32xbf16>
    %cst_74 = arith.constant dense<0.000000e+00> : vector<16x32xf32>
    %91 = tpu.matmul %87, %90, %cst_74 {dimension_numbers = #tpu.dot_dimension_numbers<[1], [0], [0], [1], [0, 0, 1, 1], [], []>} : vector<16x32xbf16>, vector<32x32xbf16>, vector<16x32xf32> -> vector<16x32xf32>
    %92 = arith.addf %88, %91 : vector<16x32xf32>
    %c0_75 = arith.constant 0 : index
    %c0_76 = arith.constant 0 : index
    %93 = vector.load %arg17[%c0_75, %c0_76] : memref<16x32xf32, #tpu.memory_space<vmem>>, vector<16x32xf32>
    tpu.vector_store %arg17[%c0_75, %c0_76], %92 {strides = array<i32>} : memref<16x32xf32, #tpu.memory_space<vmem>>, vector<16x32xf32>,
    %c1_77 = arith.constant 1 : index
    %c0_78 = arith.constant 0 : index
    %c0_79 = arith.constant 0 : index
    %94 = vector.load %arg9[%c1_77, %c0_78, %c0_79] : memref<3x32x32xbf16, #tpu.memory_space<vmem>>, vector<1x32x32xbf16>
    %95 = vector.shape_cast %94 : vector<1x32x32xbf16> to vector<32x32xbf16>
    %cst_80 = arith.constant dense<0.000000e+00> : vector<16x32xf32>
    %96 = tpu.matmul %87, %95, %cst_80 {dimension_numbers = #tpu.dot_dimension_numbers<[1], [0], [0], [1], [0, 0, 1, 1], [], []>} : vector<16x32xbf16>, vector<32x32xbf16>, vector<16x32xf32> -> vector<16x32xf32>
    %c1_81 = arith.constant 1 : index
    %c0_82 = arith.constant 0 : index
    %97 = vector.load %arg10[%c1_81, %c0_82] : memref<3x32xf32, #tpu.memory_space<vmem>>, vector<1x32xf32>
    %98 = vector.broadcast %97 : vector<1x32xf32> to vector<16x32xf32>
    %99 = arith.addf %96, %98 : vector<16x32xf32>
    %c8_83 = arith.constant 8 : index
    %c0_84 = arith.constant 0 : index
    %100 = vector.load %arg16[%c8_83, %c0_84] : memref<32x32xf32, #tpu.memory_space<vmem>>, vector<16x32xf32>
    %101 = arith.addf %100, %99 : vector<16x32xf32>
    %102 = arith.mulf %101, %3 : vector<16x32xf32>
    %c8_85 = arith.constant 8 : index
    %c0_86 = arith.constant 0 : index
    %103 = vector.load %arg16[%c8_85, %c0_86] : memref<32x32xf32, #tpu.memory_space<vmem>>, vector<16x32xf32>
    tpu.vector_store %arg16[%c8_85, %c0_86], %102 {strides = array<i32>} : memref<32x32xf32, #tpu.memory_space<vmem>>, vector<16x32xf32>,
    %c4 = arith.constant 4 : index
    %c0_87 = arith.constant 0 : index
    %104 = vector.load %arg16[%c4, %c0_87] : memref<32x32xf32, #tpu.memory_space<vmem>>, vector<16x32xf32>
    %c8_88 = arith.constant 8 : index
    %c0_89 = arith.constant 0 : index
    %105 = vector.load %arg16[%c8_88, %c0_89] : memref<32x32xf32, #tpu.memory_space<vmem>>, vector<16x32xf32>
    %c12 = arith.constant 12 : index
    %c0_90 = arith.constant 0 : index
    %106 = vector.load %arg16[%c12, %c0_90] : memref<32x32xf32, #tpu.memory_space<vmem>>, vector<16x32xf32>
    %107 = tpu.concatenate %104, %105, %106 in 1 : vector<16x32xf32>, vector<16x32xf32>, vector<16x32xf32> -> vector<16x96xf32>
    %108 = arith.truncf %107 : vector<16x96xf32> to vector<16x96xbf16>
    %c2 = arith.constant 2 : index
    %c0_91 = arith.constant 0 : index
    %c0_92 = arith.constant 0 : index
    %109 = vector.load %arg5[%c2, %c0_91, %c0_92] : memref<4x96x32xbf16, #tpu.memory_space<vmem>>, vector<1x96x32xbf16>
    %110 = vector.shape_cast %109 : vector<1x96x32xbf16> to vector<96x32xbf16>
    %cst_93 = arith.constant dense<0.000000e+00> : vector<16x32xf32>
    %111 = tpu.matmul %108, %110, %cst_93 {dimension_numbers = #tpu.dot_dimension_numbers<[1], [0], [0], [1], [0, 0, 1, 1], [], []>} : vector<16x96xbf16>, vector<96x32xbf16>, vector<16x32xf32> -> vector<16x32xf32>
    %c2_94 = arith.constant 2 : index
    %c0_95 = arith.constant 0 : index
    %112 = vector.load %arg6[%c2_94, %c0_95] : memref<4x32xf32, #tpu.memory_space<vmem>>, vector<1x32xf32>
    %113 = vector.broadcast %112 : vector<1x32xf32> to vector<16x32xf32>
    %114 = arith.addf %111, %113 : vector<16x32xf32>
    %c2_96 = arith.constant 2 : index
    %c0_97 = arith.constant 0 : index
    %c0_98 = arith.constant 0 : index
    %115 = vector.load %arg7[%c2_96, %c0_97, %c0_98] : memref<4x96x32xbf16, #tpu.memory_space<vmem>>, vector<1x96x32xbf16>
    %116 = vector.shape_cast %115 : vector<1x96x32xbf16> to vector<96x32xbf16>
    %cst_99 = arith.constant dense<0.000000e+00> : vector<16x32xf32>
    %117 = tpu.matmul %108, %116, %cst_99 {dimension_numbers = #tpu.dot_dimension_numbers<[1], [0], [0], [1], [0, 0, 1, 1], [], []>} : vector<16x96xbf16>, vector<96x32xbf16>, vector<16x32xf32> -> vector<16x32xf32>
    %c2_100 = arith.constant 2 : index
    %c0_101 = arith.constant 0 : index
    %118 = vector.load %arg8[%c2_100, %c0_101] : memref<4x32xf32, #tpu.memory_space<vmem>>, vector<1x32xf32>
    %119 = vector.broadcast %118 : vector<1x32xf32> to vector<16x32xf32>
    %120 = arith.addf %117, %119 : vector<16x32xf32>
    %121 = math.tanh %114 : vector<16x32xf32>
    %122 = arith.negf %120 : vector<16x32xf32>
    %123 = math.exp %122 : vector<16x32xf32>
    %cst_102 = arith.constant 1.000000e+00 : f32
    %124 = vector.broadcast %cst_102 : f32 to vector<16x32xf32>
    %125 = arith.addf %124, %123 : vector<16x32xf32>
    %126 = arith.divf %124, %125 : vector<16x32xf32>
    %127 = arith.mulf %121, %126 : vector<16x32xf32>
    %128 = arith.truncf %127 : vector<16x32xf32> to vector<16x32xbf16>
    %c0_103 = arith.constant 0 : index
    %c0_104 = arith.constant 0 : index
    %129 = vector.load %arg17[%c0_103, %c0_104] : memref<16x32xf32, #tpu.memory_space<vmem>>, vector<16x32xf32>
    %c2_105 = arith.constant 2 : index
    %c0_106 = arith.constant 0 : index
    %c0_107 = arith.constant 0 : index
    %130 = vector.load %arg11[%c2_105, %c0_106, %c0_107] : memref<4x32x32xbf16, #tpu.memory_space<vmem>>, vector<1x32x32xbf16>
    %131 = vector.shape_cast %130 : vector<1x32x32xbf16> to vector<32x32xbf16>
    %cst_108 = arith.constant dense<0.000000e+00> : vector<16x32xf32>
    %132 = tpu.matmul %128, %131, %cst_108 {dimension_numbers = #tpu.dot_dimension_numbers<[1], [0], [0], [1], [0, 0, 1, 1], [], []>} : vector<16x32xbf16>, vector<32x32xbf16>, vector<16x32xf32> -> vector<16x32xf32>
    %133 = arith.addf %129, %132 : vector<16x32xf32>
    %c0_109 = arith.constant 0 : index
    %c0_110 = arith.constant 0 : index
    %134 = vector.load %arg17[%c0_109, %c0_110] : memref<16x32xf32, #tpu.memory_space<vmem>>, vector<16x32xf32>
    tpu.vector_store %arg17[%c0_109, %c0_110], %133 {strides = array<i32>} : memref<16x32xf32, #tpu.memory_space<vmem>>, vector<16x32xf32>,
    %c2_111 = arith.constant 2 : index
    %c0_112 = arith.constant 0 : index
    %c0_113 = arith.constant 0 : index
    %135 = vector.load %arg9[%c2_111, %c0_112, %c0_113] : memref<3x32x32xbf16, #tpu.memory_space<vmem>>, vector<1x32x32xbf16>
    %136 = vector.shape_cast %135 : vector<1x32x32xbf16> to vector<32x32xbf16>
    %cst_114 = arith.constant dense<0.000000e+00> : vector<16x32xf32>
    %137 = tpu.matmul %128, %136, %cst_114 {dimension_numbers = #tpu.dot_dimension_numbers<[1], [0], [0], [1], [0, 0, 1, 1], [], []>} : vector<16x32xbf16>, vector<32x32xbf16>, vector<16x32xf32> -> vector<16x32xf32>
    %c2_115 = arith.constant 2 : index
    %c0_116 = arith.constant 0 : index
    %138 = vector.load %arg10[%c2_115, %c0_116] : memref<3x32xf32, #tpu.memory_space<vmem>>, vector<1x32xf32>
    %139 = vector.broadcast %138 : vector<1x32xf32> to vector<16x32xf32>
    %140 = arith.addf %137, %139 : vector<16x32xf32>
    %c8_117 = arith.constant 8 : index
    %c0_118 = arith.constant 0 : index
    %141 = vector.load %arg16[%c8_117, %c0_118] : memref<32x32xf32, #tpu.memory_space<vmem>>, vector<16x32xf32>
    %142 = arith.addf %141, %140 : vector<16x32xf32>
    %143 = arith.mulf %142, %3 : vector<16x32xf32>
    %c8_119 = arith.constant 8 : index
    %c0_120 = arith.constant 0 : index
    %144 = vector.load %arg16[%c8_119, %c0_120] : memref<32x32xf32, #tpu.memory_space<vmem>>, vector<16x32xf32>
    tpu.vector_store %arg16[%c8_119, %c0_120], %143 {strides = array<i32>} : memref<32x32xf32, #tpu.memory_space<vmem>>, vector<16x32xf32>,
    %c0_121 = arith.constant 0 : index
    %c0_122 = arith.constant 0 : index
    %145 = vector.load %arg16[%c0_121, %c0_122] : memref<32x32xf32, #tpu.memory_space<vmem>>, vector<16x32xf32>
    %c8_123 = arith.constant 8 : index
    %c0_124 = arith.constant 0 : index
    %146 = vector.load %arg16[%c8_123, %c0_124] : memref<32x32xf32, #tpu.memory_space<vmem>>, vector<16x32xf32>
    %c16 = arith.constant 16 : index
    %c0_125 = arith.constant 0 : index
    %147 = vector.load %arg16[%c16, %c0_125] : memref<32x32xf32, #tpu.memory_space<vmem>>, vector<16x32xf32>
    %148 = tpu.concatenate %145, %146, %147 in 1 : vector<16x32xf32>, vector<16x32xf32>, vector<16x32xf32> -> vector<16x96xf32>
    %149 = arith.truncf %148 : vector<16x96xf32> to vector<16x96xbf16>
    %c3 = arith.constant 3 : index
    %c0_126 = arith.constant 0 : index
    %c0_127 = arith.constant 0 : index
    %150 = vector.load %arg5[%c3, %c0_126, %c0_127] : memref<4x96x32xbf16, #tpu.memory_space<vmem>>, vector<1x96x32xbf16>
    %151 = vector.shape_cast %150 : vector<1x96x32xbf16> to vector<96x32xbf16>
    %cst_128 = arith.constant dense<0.000000e+00> : vector<16x32xf32>
    %152 = tpu.matmul %149, %151, %cst_128 {dimension_numbers = #tpu.dot_dimension_numbers<[1], [0], [0], [1], [0, 0, 1, 1], [], []>} : vector<16x96xbf16>, vector<96x32xbf16>, vector<16x32xf32> -> vector<16x32xf32>
    %c3_129 = arith.constant 3 : index
    %c0_130 = arith.constant 0 : index
    %153 = vector.load %arg6[%c3_129, %c0_130] : memref<4x32xf32, #tpu.memory_space<vmem>>, vector<1x32xf32>
    %154 = vector.broadcast %153 : vector<1x32xf32> to vector<16x32xf32>
    %155 = arith.addf %152, %154 : vector<16x32xf32>
    %c3_131 = arith.constant 3 : index
    %c0_132 = arith.constant 0 : index
    %c0_133 = arith.constant 0 : index
    %156 = vector.load %arg7[%c3_131, %c0_132, %c0_133] : memref<4x96x32xbf16, #tpu.memory_space<vmem>>, vector<1x96x32xbf16>
    %157 = vector.shape_cast %156 : vector<1x96x32xbf16> to vector<96x32xbf16>
    %cst_134 = arith.constant dense<0.000000e+00> : vector<16x32xf32>
    %158 = tpu.matmul %149, %157, %cst_134 {dimension_numbers = #tpu.dot_dimension_numbers<[1], [0], [0], [1], [0, 0, 1, 1], [], []>} : vector<16x96xbf16>, vector<96x32xbf16>, vector<16x32xf32> -> vector<16x32xf32>
    %c3_135 = arith.constant 3 : index
    %c0_136 = arith.constant 0 : index
    %159 = vector.load %arg8[%c3_135, %c0_136] : memref<4x32xf32, #tpu.memory_space<vmem>>, vector<1x32xf32>
    %160 = vector.broadcast %159 : vector<1x32xf32> to vector<16x32xf32>
    %161 = arith.addf %158, %160 : vector<16x32xf32>
    %162 = math.tanh %155 : vector<16x32xf32>
    %163 = arith.negf %161 : vector<16x32xf32>
    %164 = math.exp %163 : vector<16x32xf32>
    %cst_137 = arith.constant 1.000000e+00 : f32
    %165 = vector.broadcast %cst_137 : f32 to vector<16x32xf32>
    %166 = arith.addf %165, %164 : vector<16x32xf32>
    %167 = arith.divf %165, %166 : vector<16x32xf32>
    %168 = arith.mulf %162, %167 : vector<16x32xf32>
    %169 = arith.truncf %168 : vector<16x32xf32> to vector<16x32xbf16>
    %c3_138 = arith.constant 3 : index
    %c0_139 = arith.constant 0 : index
    %c0_140 = arith.constant 0 : index
    %170 = vector.load %arg11[%c3_138, %c0_139, %c0_140] : memref<4x32x32xbf16, #tpu.memory_space<vmem>>, vector<1x32x32xbf16>
    %171 = vector.shape_cast %170 : vector<1x32x32xbf16> to vector<32x32xbf16>
    %c0_141 = arith.constant 0 : index
    %c0_142 = arith.constant 0 : index
    %172 = vector.load %arg17[%c0_141, %c0_142] : memref<16x32xf32, #tpu.memory_space<vmem>>, vector<16x32xf32>
    %cst_143 = arith.constant dense<0.000000e+00> : vector<16x32xf32>
    %173 = tpu.matmul %169, %171, %cst_143 {dimension_numbers = #tpu.dot_dimension_numbers<[1], [0], [0], [1], [0, 0, 1, 1], [], []>} : vector<16x32xbf16>, vector<32x32xbf16>, vector<16x32xf32> -> vector<16x32xf32>
    %174 = arith.addf %172, %173 : vector<16x32xf32>
    %c0_144 = arith.constant 0 : index
    %c0_145 = arith.constant 0 : index
    %175 = vector.load %arg17[%c0_144, %c0_145] : memref<16x32xf32, #tpu.memory_space<vmem>>, vector<16x32xf32>
    tpu.vector_store %arg17[%c0_144, %c0_145], %174 {strides = array<i32>} : memref<16x32xf32, #tpu.memory_space<vmem>>, vector<16x32xf32>,
    %c0_146 = arith.constant 0 : index
    %c0_147 = arith.constant 0 : index
    %176 = vector.load %arg17[%c0_146, %c0_147] : memref<16x32xf32, #tpu.memory_space<vmem>>, vector<16x32xf32>
    %c0_148 = arith.constant 0 : index
    %c0_149 = arith.constant 0 : index
    %177 = vector.load %arg12[%c0_148, %c0_149] : memref<1x32xf32, #tpu.memory_space<vmem>>, vector<1x32xf32>
    %178 = vector.broadcast %177 : vector<1x32xf32> to vector<16x32xf32>
    %179 = arith.addf %176, %178 : vector<16x32xf32>
    %180 = arith.mulf %179, %3 : vector<16x32xf32>
    %181 = arith.truncf %180 : vector<16x32xf32> to vector<16x32xbf16>
    %c0_150 = arith.constant 0 : index
    %c0_151 = arith.constant 0 : index
    %182 = vector.load %arg13[%c0_150, %c0_151] : memref<32x128xbf16, #tpu.memory_space<vmem>>, vector<32x128xbf16>
    %cst_152 = arith.constant dense<0.000000e+00> : vector<16x128xf32>
    %183 = tpu.matmul %181, %182, %cst_152 {dimension_numbers = #tpu.dot_dimension_numbers<[1], [0], [0], [1], [0, 0, 1, 1], [], []>} : vector<16x32xbf16>, vector<32x128xbf16>, vector<16x128xf32> -> vector<16x128xf32>
    %c0_153 = arith.constant 0 : index
    %c0_154 = arith.constant 0 : index
    %184 = vector.load %arg14[%c0_153, %c0_154] : memref<1x128xf32, #tpu.memory_space<vmem>>, vector<1x128xf32>
    %185 = vector.broadcast %184 : vector<1x128xf32> to vector<16x128xf32>
    %186 = arith.addf %183, %185 : vector<16x128xf32>
    %187 = vector.broadcast %1 : vector<16x1xf32> to vector<16x128xf32>
    %188 = arith.mulf %186, %187 : vector<16x128xf32>
    %189 = arith.truncf %188 : vector<16x128xf32> to vector<16x128xbf16>
    %c0_155 = arith.constant 0 : index
    %c0_156 = arith.constant 0 : index
    %c0_157 = arith.constant 0 : index
    %190 = vector.load %arg15[%c0_155, %c0_156, %c0_157] : memref<1x16x128xbf16, #tpu.memory_space<vmem>>, vector<1x16x128xbf16>
    %191 = vector.shape_cast %190 : vector<1x16x128xbf16> to vector<16x128xbf16>
    %192 = vector.shape_cast %189 : vector<16x128xbf16> to vector<1x16x128xbf16>
    tpu.vector_store %arg15[%c0_155, %c0_156, %c0_157], %192 {strides = array<i32>} : memref<1x16x128xbf16, #tpu.memory_space<vmem>>, vector<1x16x128xbf16>,
    return
  }
  func.func @transform_0(%arg0: i32) -> (i32, i32, i32) {
    %c0_i32 = arith.constant 0 : i32
    %c0_i32_0 = arith.constant 0 : i32
    %c0_i32_1 = arith.constant 0 : i32
    return %arg0, %c0_i32, %c0_i32_0 : i32, i32, i32
  }
  func.func @transform_1(%arg0: i32) -> (i32, i32, i32) {
    %c0_i32 = arith.constant 0 : i32
    %c0_i32_0 = arith.constant 0 : i32
    %c0_i32_1 = arith.constant 0 : i32
    return %arg0, %c0_i32, %c0_i32_0 : i32, i32, i32
  }
  func.func @transform_2(%arg0: i32) -> (i32, i32) {
    %c0_i32 = arith.constant 0 : i32
    %c0_i32_0 = arith.constant 0 : i32
    %c0_i32_1 = arith.constant 0 : i32
    return %c0_i32, %c0_i32_0 : i32, i32
  }
  func.func @transform_3(%arg0: i32) -> (i32, i32) {
    %c0_i32 = arith.constant 0 : i32
    %c0_i32_0 = arith.constant 0 : i32
    %c0_i32_1 = arith.constant 0 : i32
    return %c0_i32, %c0_i32_0 : i32, i32
  }
  func.func @transform_4(%arg0: i32) -> (i32, i32, i32) {
    %c0_i32 = arith.constant 0 : i32
    %c0_i32_0 = arith.constant 0 : i32
    %c0_i32_1 = arith.constant 0 : i32
    %c0_i32_2 = arith.constant 0 : i32
    return %c0_i32, %c0_i32_0, %c0_i32_1 : i32, i32, i32
  }
  func.func @transform_5(%arg0: i32) -> (i32, i32) {
    %c0_i32 = arith.constant 0 : i32
    %c0_i32_0 = arith.constant 0 : i32
    %c0_i32_1 = arith.constant 0 : i32
    return %c0_i32, %c0_i32_0 : i32, i32
  }
  func.func @transform_6(%arg0: i32) -> (i32, i32, i32) {
    %c0_i32 = arith.constant 0 : i32
    %c0_i32_0 = arith.constant 0 : i32
    %c0_i32_1 = arith.constant 0 : i32
    %c0_i32_2 = arith.constant 0 : i32
    return %c0_i32, %c0_i32_0, %c0_i32_1 : i32, i32, i32
  }
  func.func @transform_7(%arg0: i32) -> (i32, i32) {
    %c0_i32 = arith.constant 0 : i32
    %c0_i32_0 = arith.constant 0 : i32
    %c0_i32_1 = arith.constant 0 : i32
    return %c0_i32, %c0_i32_0 : i32, i32
  }
  func.func @transform_8(%arg0: i32) -> (i32, i32, i32) {
    %c0_i32 = arith.constant 0 : i32
    %c0_i32_0 = arith.constant 0 : i32
    %c0_i32_1 = arith.constant 0 : i32
    %c0_i32_2 = arith.constant 0 : i32
    return %c0_i32, %c0_i32_0, %c0_i32_1 : i32, i32, i32
  }
  func.func @transform_9(%arg0: i32) -> (i32, i32) {
    %c0_i32 = arith.constant 0 : i32
    %c0_i32_0 = arith.constant 0 : i32
    %c0_i32_1 = arith.constant 0 : i32
    return %c0_i32, %c0_i32_0 : i32, i32
  }
  func.func @transform_10(%arg0: i32) -> (i32, i32, i32) {
    %c0_i32 = arith.constant 0 : i32
    %c0_i32_0 = arith.constant 0 : i32
    %c0_i32_1 = arith.constant 0 : i32
    %c0_i32_2 = arith.constant 0 : i32
    return %c0_i32, %c0_i32_0, %c0_i32_1 : i32, i32, i32
  }
  func.func @transform_11(%arg0: i32) -> (i32, i32) {
    %c0_i32 = arith.constant 0 : i32
    %c0_i32_0 = arith.constant 0 : i32
    %c0_i32_1 = arith.constant 0 : i32
    return %c0_i32, %c0_i32_0 : i32, i32
  }
  func.func @transform_12(%arg0: i32) -> (i32, i32) {
    %c0_i32 = arith.constant 0 : i32
    %c0_i32_0 = arith.constant 0 : i32
    %c0_i32_1 = arith.constant 0 : i32
    return %c0_i32, %c0_i32_0 : i32, i32
  }
  func.func @transform_13(%arg0: i32) -> (i32, i32) {
    %c0_i32 = arith.constant 0 : i32
    %c0_i32_0 = arith.constant 0 : i32
    %c0_i32_1 = arith.constant 0 : i32
    return %c0_i32, %c0_i32_0 : i32, i32
  }
  func.func @transform_14(%arg0: i32) -> (i32, i32, i32) {
    %c0_i32 = arith.constant 0 : i32
    %c0_i32_0 = arith.constant 0 : i32
    %c0_i32_1 = arith.constant 0 : i32
    return %arg0, %c0_i32, %c0_i32_0 : i32, i32, i32
  }
}

</mosaic_0001>

<llo_original>
// kernel: tpu_custom_call.1
$region0: #{tpu_custom_call.1}
  #allocation0 [shape = 'u32[]', space=smem, size = 0x4, offset = 0x4, fixed_abs, tag = 'smem constant byte address 0x4 - core index']
  #allocation1 [shape = 'u32[144,128]{1,0:T(1,128)}', space=vmem, size = 0x12000, scoped, tag = 'internal scratch']
  #allocation2 [shape = 'f32[32,32]{1,0:T(8,128)}', space=vmem, size = 0x4000, scoped, tag = 'scratch operand']
  #allocation3 [shape = 'f32[16,32]{1,0:T(8,128)}', space=vmem, size = 0x2000, scoped, tag = 'scratch operand']
  %s0 = inlined_call_operand.vmem [shape: f32[2,16,8], index: 0, kind: input, shape index: {}]
  %s1 = inlined_call_operand.vmem [shape: f32[2,16,1], index: 1, kind: input, shape index: {}]
  %s2 = inlined_call_operand.vmem [shape: bf16[8,32], index: 2, kind: input, shape index: {}]
  %s3 = inlined_call_operand.vmem [shape: f32[1,32], index: 3, kind: input, shape index: {}]
  %s4 = inlined_call_operand.vmem [shape: bf16[4,96,32], index: 4, kind: input, shape index: {}]
  %s5 = inlined_call_operand.vmem [shape: f32[4,32], index: 5, kind: input, shape index: {}]
  %s6 = inlined_call_operand.vmem [shape: bf16[4,96,32], index: 6, kind: input, shape index: {}]
  %s7 = inlined_call_operand.vmem [shape: f32[4,32], index: 7, kind: input, shape index: {}]
  %s8 = inlined_call_operand.vmem [shape: bf16[3,32,32], index: 8, kind: input, shape index: {}]
  %s9 = inlined_call_operand.vmem [shape: f32[3,32], index: 9, kind: input, shape index: {}]
  %s10 = inlined_call_operand.vmem [shape: bf16[4,32,32], index: 10, kind: input, shape index: {}]
  %s11 = inlined_call_operand.vmem [shape: f32[1,32], index: 11, kind: input, shape index: {}]
  %s12 = inlined_call_operand.vmem [shape: bf16[32,128], index: 12, kind: input, shape index: {}]
  %s13 = inlined_call_operand.vmem [shape: f32[1,128], index: 13, kind: input, shape index: {}]
  %s14 = inlined_call_operand.hbm [shape: bf16[2,16,128], index: 14, kind: output, shape index: {}]
  %s15 = sld [smem:[#allocation0]]
  $region89: #{tpu_custom_call.1} parent=0
    _
  %s17 = ssub.s32 1, %s15
  %s18 = scalar_select 0, %s17, %s15
  $region1: #{tpu_custom_call.1} parent=0
    #allocation4 [shape = 'u8[8192]{0}', space=vmem, size = 0x2000, scoped, tag = 'output window, operand 0']
    #allocation5 [shape = 's32[2]{0}', space=sflag, size = 0x8, scoped, tag = 'scoped memory for tpu_custom_call.1']
    %19 = vsyncpa [#allocation5], 0
    %s20 = scalar_lea.sflag [#allocation5], 1
    %21 = vsyncpa %s20, 0
    loop: start=0, step=1, limit=4
    $region2: #{tpu_custom_call.1} parent=1 // loop_pre_header
      _
    $region3: #{tpu_custom_call.1} parent=1 // loop_header
      %s23 = sphi 0, %s27
      %p24 = scmp.ge.s32.totalorder %s23, 4
      %s33 = sphi 0, %s35
      %s36 = sphi 0, %s33
      %s37 = sphi 0, %s36
      %s53 = sphi 0, %s37
      %s59 = sphi 0, %s61
      %s62 = sphi 0, %s59
      %s63 = sphi 0, %s62
      %s79 = sphi 0, %s63
      %s83 = sphi 0, %s83
      %s85 = sphi 0, %s83
      %s86 = sphi 0, %s85
      %s100 = sphi 0, %s86
      %s104 = sphi 0, %s104
      %s106 = sphi 0, %s104
      %s107 = sphi 0, %s106
      %s121 = sphi 0, %s107
      %s125 = sphi 0, %s125
      %s127 = sphi 0, %s125
      %s128 = sphi 0, %s127
      %s142 = sphi 0, %s128
      %s146 = sphi 0, %s146
      %s148 = sphi 0, %s146
      %s149 = sphi 0, %s148
      %s163 = sphi 0, %s149
      %s167 = sphi 0, %s167
      %s169 = sphi 0, %s167
      %s170 = sphi 0, %s169
      %s184 = sphi 0, %s170
      %s188 = sphi 0, %s188
      %s190 = sphi 0, %s188
      %s191 = sphi 0, %s190
      %s205 = sphi 0, %s191
      %s209 = sphi 0, %s209
      %s211 = sphi 0, %s209
      %s212 = sphi 0, %s211
      %s226 = sphi 0, %s212
      %s230 = sphi 0, %s230
      %s232 = sphi 0, %s230
      %s233 = sphi 0, %s232
      %s247 = sphi 0, %s233
      %s251 = sphi 0, %s251
      %s253 = sphi 0, %s251
      %s254 = sphi 0, %s253
      %s268 = sphi 0, %s254
      %s272 = sphi 0, %s272
      %s274 = sphi 0, %s272
      %s275 = sphi 0, %s274
      %s289 = sphi 0, %s275
      %s293 = sphi 0, %s293
      %s295 = sphi 0, %s293
      %s296 = sphi 0, %s295
      %s310 = sphi 0, %s296
      %s314 = sphi 0, %s314
      %s316 = sphi 0, %s314
      %s317 = sphi 0, %s316
      %s331 = sphi 0, %s317
      %s337 = sphi 0, %s339
      %s340 = sphi 0, %s337
      %s341 = sphi 0, %s340
      %s357 = sphi 0, %s341
    $region4: #{tpu_custom_call.1} parent=1 // loop_header_branch
      %26 = sbr.rel (%p24) target = $region8
    $region5: #{tpu_custom_call.1} parent=1 // loop_body
      %s28 = ssub.s32 %s23, 1
      %s29 = ssub.s32 %s23, 2
      %s30 = sadd.s32 %s23, 1
      %s31 = ssub.s32 %s23, %s30
      %p32 = scmp.eq.s32.totalorder %s31, 0
      %s34 = sadd.s32 %s33, 1
      %s35 = scalar_select %p32, %s33, %s34
      %p38 = pneg %p32
      %p39 = scmp.eq.s32.totalorder %s23, 1
      %p40 = por %p38, %p39
      %p41 = scmp.ne.s32.totalorder %s33, %s36
      %p42 = scmp.eq.s32.totalorder %s23, 0
      %p43 = por %p41, %p42
      %p44 = scmp.ne.s32.totalorder %s33, %s36
      %p45 = scmp.eq.s32.totalorder %s28, 1
      %p46 = por %p44, %p45
      %p47 = scmp.ne.s32.totalorder %s36, %s37
      %p48 = scmp.eq.s32.totalorder %s28, 0
      %p49 = por %p47, %p48
      %p50 = scmp.ne.s32.totalorder %s36, %s37
      %p51 = scmp.eq.s32.totalorder %s29, 1
      %p52 = por %p50, %p51
      %p54 = scmp.ne.s32.totalorder %s37, %s53
      %p55 = scmp.eq.s32.totalorder %s29, 0
      %p56 = por %p54, %p55
      %s57 = ssub.s32 %s23, %s30
      %p58 = scmp.eq.s32.totalorder %s57, 0
      %s60 = sadd.s32 %s59, 1
      %s61 = scalar_select %p58, %s59, %s60
      %p64 = pneg %p58
      %p65 = scmp.eq.s32.totalorder %s23, 1
      %p66 = por %p64, %p65
      %p67 = scmp.ne.s32.totalorder %s59, %s62
      %p68 = scmp.eq.s32.totalorder %s23, 0
      %p69 = por %p67, %p68
      %p70 = scmp.ne.s32.totalorder %s59, %s62
      %p71 = scmp.eq.s32.totalorder %s28, 1
      %p72 = por %p70, %p71
      %p73 = scmp.ne.s32.totalorder %s62, %s63
      %p74 = scmp.eq.s32.totalorder %s28, 0
      %p75 = por %p73, %p74
      %p76 = scmp.ne.s32.totalorder %s62, %s63
      %p77 = scmp.eq.s32.totalorder %s29, 1
      %p78 = por %p76, %p77
      %p80 = scmp.ne.s32.totalorder %s63, %s79
      %p81 = scmp.eq.s32.totalorder %s29, 0
      %p82 = por %p80, %p81
      %s84 = sadd.s32 %s83, 1
      %p87 = scmp.eq.s32.totalorder %s23, 1
      %p88 = scmp.ne.s32.totalorder %s83, %s85
      %p89 = scmp.eq.s32.totalorder %s23, 0
      %p90 = por %p88, %p89
      %p91 = scmp.ne.s32.totalorder %s83, %s85
      %p92 = scmp.eq.s32.totalorder %s28, 1
      %p93 = por %p91, %p92
      %p94 = scmp.ne.s32.totalorder %s85, %s86
      %p95 = scmp.eq.s32.totalorder %s28, 0
      %p96 = por %p94, %p95
      %p97 = scmp.ne.s32.totalorder %s85, %s86
      %p98 = scmp.eq.s32.totalorder %s29, 1
      %p99 = por %p97, %p98
      %p101 = scmp.ne.s32.totalorder %s86, %s100
      %p102 = scmp.eq.s32.totalorder %s29, 0
      %p103 = por %p101, %p102
      %s105 = sadd.s32 %s104, 1
      %p108 = scmp.eq.s32.totalorder %s23, 1
      %p109 = scmp.ne.s32.totalorder %s104, %s106
      %p110 = scmp.eq.s32.totalorder %s23, 0
      %p111 = por %p109, %p110
      %p112 = scmp.ne.s32.totalorder %s104, %s106
      %p113 = scmp.eq.s32.totalorder %s28, 1
      %p114 = por %p112, %p113
      %p115 = scmp.ne.s32.totalorder %s106, %s107
      %p116 = scmp.eq.s32.totalorder %s28, 0
      %p117 = por %p115, %p116
      %p118 = scmp.ne.s32.totalorder %s106, %s107
      %p119 = scmp.eq.s32.totalorder %s29, 1
      %p120 = por %p118, %p119
      %p122 = scmp.ne.s32.totalorder %s107, %s121
      %p123 = scmp.eq.s32.totalorder %s29, 0
      %p124 = por %p122, %p123
      %s126 = sadd.s32 %s125, 1
      %p129 = scmp.eq.s32.totalorder %s23, 1
      %p130 = scmp.ne.s32.totalorder %s125, %s127
      %p131 = scmp.eq.s32.totalorder %s23, 0
      %p132 = por %p130, %p131
      %p133 = scmp.ne.s32.totalorder %s125, %s127
      %p134 = scmp.eq.s32.totalorder %s28, 1
      %p135 = por %p133, %p134
      %p136 = scmp.ne.s32.totalorder %s127, %s128
      %p137 = scmp.eq.s32.totalorder %s28, 0
      %p138 = por %p136, %p137
      %p139 = scmp.ne.s32.totalorder %s127, %s128
      %p140 = scmp.eq.s32.totalorder %s29, 1
      %p141 = por %p139, %p140
      %p143 = scmp.ne.s32.totalorder %s128, %s142
      %p144 = scmp.eq.s32.totalorder %s29, 0
      %p145 = por %p143, %p144
      %s147 = sadd.s32 %s146, 1
      %p150 = scmp.eq.s32.totalorder %s23, 1
      %p151 = scmp.ne.s32.totalorder %s146, %s148
      %p152 = scmp.eq.s32.totalorder %s23, 0
      %p153 = por %p151, %p152
      %p154 = scmp.ne.s32.totalorder %s146, %s148
      %p155 = scmp.eq.s32.totalorder %s28, 1
      %p156 = por %p154, %p155
      %p157 = scmp.ne.s32.totalorder %s148, %s149
      %p158 = scmp.eq.s32.totalorder %s28, 0
      %p159 = por %p157, %p158
      %p160 = scmp.ne.s32.totalorder %s148, %s149
      %p161 = scmp.eq.s32.totalorder %s29, 1
      %p162 = por %p160, %p161
      %p164 = scmp.ne.s32.totalorder %s149, %s163
      %p165 = scmp.eq.s32.totalorder %s29, 0
      %p166 = por %p164, %p165
      %s168 = sadd.s32 %s167, 1
      %p171 = scmp.eq.s32.totalorder %s23, 1
      %p172 = scmp.ne.s32.totalorder %s167, %s169
      %p173 = scmp.eq.s32.totalorder %s23, 0
      %p174 = por %p172, %p173
      %p175 = scmp.ne.s32.totalorder %s167, %s169
      %p176 = scmp.eq.s32.totalorder %s28, 1
      %p177 = por %p175, %p176
      %p178 = scmp.ne.s32.totalorder %s169, %s170
      %p179 = scmp.eq.s32.totalorder %s28, 0
      %p180 = por %p178, %p179
      %p181 = scmp.ne.s32.totalorder %s169, %s170
      %p182 = scmp.eq.s32.totalorder %s29, 1
      %p183 = por %p181, %p182
      %p185 = scmp.ne.s32.totalorder %s170, %s184
      %p186 = scmp.eq.s32.totalorder %s29, 0
      %p187 = por %p185, %p186
      %s189 = sadd.s32 %s188, 1
      %p192 = scmp.eq.s32.totalorder %s23, 1
      %p193 = scmp.ne.s32.totalorder %s188, %s190
      %p194 = scmp.eq.s32.totalorder %s23, 0
      %p195 = por %p193, %p194
      %p196 = scmp.ne.s32.totalorder %s188, %s190
      %p197 = scmp.eq.s32.totalorder %s28, 1
      %p198 = por %p196, %p197
      %p199 = scmp.ne.s32.totalorder %s190, %s191
      %p200 = scmp.eq.s32.totalorder %s28, 0
      %p201 = por %p199, %p200
      %p202 = scmp.ne.s32.totalorder %s190, %s191
      %p203 = scmp.eq.s32.totalorder %s29, 1
      %p204 = por %p202, %p203
      %p206 = scmp.ne.s32.totalorder %s191, %s205
      %p207 = scmp.eq.s32.totalorder %s29, 0
      %p208 = por %p206, %p207
      %s210 = sadd.s32 %s209, 1
      %p213 = scmp.eq.s32.totalorder %s23, 1
      %p214 = scmp.ne.s32.totalorder %s209, %s211
      %p215 = scmp.eq.s32.totalorder %s23, 0
      %p216 = por %p214, %p215
      %p217 = scmp.ne.s32.totalorder %s209, %s211
      %p218 = scmp.eq.s32.totalorder %s28, 1
      %p219 = por %p217, %p218
      %p220 = scmp.ne.s32.totalorder %s211, %s212
      %p221 = scmp.eq.s32.totalorder %s28, 0
      %p222 = por %p220, %p221
      %p223 = scmp.ne.s32.totalorder %s211, %s212
      %p224 = scmp.eq.s32.totalorder %s29, 1
      %p225 = por %p223, %p224
      %p227 = scmp.ne.s32.totalorder %s212, %s226
      %p228 = scmp.eq.s32.totalorder %s29, 0
      %p229 = por %p227, %p228
      %s231 = sadd.s32 %s230, 1
      %p234 = scmp.eq.s32.totalorder %s23, 1
      %p235 = scmp.ne.s32.totalorder %s230, %s232
      %p236 = scmp.eq.s32.totalorder %s23, 0
      %p237 = por %p235, %p236
      %p238 = scmp.ne.s32.totalorder %s230, %s232
      %p239 = scmp.eq.s32.totalorder %s28, 1
      %p240 = por %p238, %p239
      %p241 = scmp.ne.s32.totalorder %s232, %s233
      %p242 = scmp.eq.s32.totalorder %s28, 0
      %p243 = por %p241, %p242
      %p244 = scmp.ne.s32.totalorder %s232, %s233
      %p245 = scmp.eq.s32.totalorder %s29, 1
      %p246 = por %p244, %p245
      %p248 = scmp.ne.s32.totalorder %s233, %s247
      %p249 = scmp.eq.s32.totalorder %s29, 0
      %p250 = por %p248, %p249
      %s252 = sadd.s32 %s251, 1
      %p255 = scmp.eq.s32.totalorder %s23, 1
      %p256 = scmp.ne.s32.totalorder %s251, %s253
      %p257 = scmp.eq.s32.totalorder %s23, 0
      %p258 = por %p256, %p257
      %p259 = scmp.ne.s32.totalorder %s251, %s253
      %p260 = scmp.eq.s32.totalorder %s28, 1
      %p261 = por %p259, %p260
      %p262 = scmp.ne.s32.totalorder %s253, %s254
      %p263 = scmp.eq.s32.totalorder %s28, 0
      %p264 = por %p262, %p263
      %p265 = scmp.ne.s32.totalorder %s253, %s254
      %p266 = scmp.eq.s32.totalorder %s29, 1
      %p267 = por %p265, %p266
      %p269 = scmp.ne.s32.totalorder %s254, %s268
      %p270 = scmp.eq.s32.totalorder %s29, 0
      %p271 = por %p269, %p270
      %s273 = sadd.s32 %s272, 1
      %p276 = scmp.eq.s32.totalorder %s23, 1
      %p277 = scmp.ne.s32.totalorder %s272, %s274
      %p278 = scmp.eq.s32.totalorder %s23, 0
      %p279 = por %p277, %p278
      %p280 = scmp.ne.s32.totalorder %s272, %s274
      %p281 = scmp.eq.s32.totalorder %s28, 1
      %p282 = por %p280, %p281
      %p283 = scmp.ne.s32.totalorder %s274, %s275
      %p284 = scmp.eq.s32.totalorder %s28, 0
      %p285 = por %p283, %p284
      %p286 = scmp.ne.s32.totalorder %s274, %s275
      %p287 = scmp.eq.s32.totalorder %s29, 1
      %p288 = por %p286, %p287
      %p290 = scmp.ne.s32.totalorder %s275, %s289
      %p291 = scmp.eq.s32.totalorder %s29, 0
      %p292 = por %p290, %p291
      %s294 = sadd.s32 %s293, 1
      %p297 = scmp.eq.s32.totalorder %s23, 1
      %p298 = scmp.ne.s32.totalorder %s293, %s295
      %p299 = scmp.eq.s32.totalorder %s23, 0
      %p300 = por %p298, %p299
      %p301 = scmp.ne.s32.totalorder %s293, %s295
      %p302 = scmp.eq.s32.totalorder %s28, 1
      %p303 = por %p301, %p302
      %p304 = scmp.ne.s32.totalorder %s295, %s296
      %p305 = scmp.eq.s32.totalorder %s28, 0
      %p306 = por %p304, %p305
      %p307 = scmp.ne.s32.totalorder %s295, %s296
      %p308 = scmp.eq.s32.totalorder %s29, 1
      %p309 = por %p307, %p308
      %p311 = scmp.ne.s32.totalorder %s296, %s310
      %p312 = scmp.eq.s32.totalorder %s29, 0
      %p313 = por %p311, %p312
      %s315 = sadd.s32 %s314, 1
      %p318 = scmp.eq.s32.totalorder %s23, 1
      %p319 = scmp.ne.s32.totalorder %s314, %s316
      %p320 = scmp.eq.s32.totalorder %s23, 0
      %p321 = por %p319, %p320
      %p322 = scmp.ne.s32.totalorder %s314, %s316
      %p323 = scmp.eq.s32.totalorder %s28, 1
      %p324 = por %p322, %p323
      %p325 = scmp.ne.s32.totalorder %s316, %s317
      %p326 = scmp.eq.s32.totalorder %s28, 0
      %p327 = por %p325, %p326
      %p328 = scmp.ne.s32.totalorder %s316, %s317
      %p329 = scmp.eq.s32.totalorder %s29, 1
      %p330 = por %p328, %p329
      %p332 = scmp.ne.s32.totalorder %s317, %s331
      %p333 = scmp.eq.s32.totalorder %s29, 0
      %p334 = por %p332, %p333
      %s335 = ssub.s32 %s23, %s30
      %p336 = scmp.eq.s32.totalorder %s335, 0
      %s338 = sadd.s32 %s337, 1
      %s339 = scalar_select %p336, %s337, %s338
      %p342 = pneg %p336
      %p343 = scmp.eq.s32.totalorder %s23, 1
      %p344 = por %p342, %p343
      %p345 = scmp.ne.s32.totalorder %s337, %s340
      %p346 = scmp.eq.s32.totalorder %s23, 0
      %p347 = por %p345, %p346
      %p348 = scmp.ne.s32.totalorder %s337, %s340
      %p349 = scmp.eq.s32.totalorder %s28, 1
      %p350 = por %p348, %p349
      %p351 = scmp.ne.s32.totalorder %s340, %s341
      %p352 = scmp.eq.s32.totalorder %s28, 0
      %p353 = por %p351, %p352
      %p354 = scmp.ne.s32.totalorder %s340, %s341
      %p355 = scmp.eq.s32.totalorder %s29, 1
      %p356 = por %p354, %p355
      %p358 = scmp.ne.s32.totalorder %s341, %s357
      %p359 = scmp.eq.s32.totalorder %s29, 0
      %p360 = por %p358, %p359
      %p361 = scmp.le.s32.totalorder 1, %s23
      %p362 = scmp.lt.s32.totalorder %s23, 3
      %p363 = pnand %p361, %p362
      %p364 = pneg %p363
      // Predicated region
      $region9: #{tpu_custom_call.1} parent=5 // pred_check
        _
      $region10: #{tpu_custom_call.1} parent=5 // pred_check_branch
        %366 = sbr.rel (%p363) target = $region12
      $region11: #{tpu_custom_call.1} parent=5 // pred_region
        %s367 = ssub.s32 %s23, 1
        // Predicated region
        $region13: #{tpu_custom_call.1} parent=11 // pred_check
          %p368 = pneg %p96
        $region14: #{tpu_custom_call.1} parent=11 // pred_check_branch
          %370 = sbr.rel (%p368) target = $region16
        $region15: #{tpu_custom_call.1} parent=11 // pred_region
          _
        $region16: #{tpu_custom_call.1} parent=11 // pred_fallthru
          _
        // Predicated region
        $region17: #{tpu_custom_call.1} parent=11 // pred_check
          %p371 = pneg %p117
        $region18: #{tpu_custom_call.1} parent=11 // pred_check_branch
          %373 = sbr.rel (%p371) target = $region20
        $region19: #{tpu_custom_call.1} parent=11 // pred_region
          _
        $region20: #{tpu_custom_call.1} parent=11 // pred_fallthru
          _
        // Predicated region
        $region21: #{tpu_custom_call.1} parent=11 // pred_check
          %p374 = pneg %p138
        $region22: #{tpu_custom_call.1} parent=11 // pred_check_branch
          %376 = sbr.rel (%p374) target = $region24
        $region23: #{tpu_custom_call.1} parent=11 // pred_region
          _
        $region24: #{tpu_custom_call.1} parent=11 // pred_fallthru
          _
        // Predicated region
        $region25: #{tpu_custom_call.1} parent=11 // pred_check
          %p377 = pneg %p159
        $region26: #{tpu_custom_call.1} parent=11 // pred_check_branch
          %379 = sbr.rel (%p377) target = $region28
        $region27: #{tpu_custom_call.1} parent=11 // pred_region
          _
        $region28: #{tpu_custom_call.1} parent=11 // pred_fallthru
          _
        // Predicated region
        $region29: #{tpu_custom_call.1} parent=11 // pred_check
          %p380 = pneg %p180
        $region30: #{tpu_custom_call.1} parent=11 // pred_check_branch
          %382 = sbr.rel (%p380) target = $region32
        $region31: #{tpu_custom_call.1} parent=11 // pred_region
          _
        $region32: #{tpu_custom_call.1} parent=11 // pred_fallthru
          _
        // Predicated region
        $region33: #{tpu_custom_call.1} parent=11 // pred_check
          %p383 = pneg %p201
        $region34: #{tpu_custom_call.1} parent=11 // pred_check_branch
          %385 = sbr.rel (%p383) target = $region36
        $region35: #{tpu_custom_call.1} parent=11 // pred_region
          _
        $region36: #{tpu_custom_call.1} parent=11 // pred_fallthru
          _
        // Predicated region
        $region37: #{tpu_custom_call.1} parent=11 // pred_check
          %p386 = pneg %p222
        $region38: #{tpu_custom_call.1} parent=11 // pred_check_branch
          %388 = sbr.rel (%p386) target = $region40
        $region39: #{tpu_custom_call.1} parent=11 // pred_region
          _
        $region40: #{tpu_custom_call.1} parent=11 // pred_fallthru
          _
        // Predicated region
        $region41: #{tpu_custom_call.1} parent=11 // pred_check
          %p389 = pneg %p243
        $region42: #{tpu_custom_call.1} parent=11 // pred_check_branch
          %391 = sbr.rel (%p389) target = $region44
        $region43: #{tpu_custom_call.1} parent=11 // pred_region
          _
        $region44: #{tpu_custom_call.1} parent=11 // pred_fallthru
          _
        // Predicated region
        $region45: #{tpu_custom_call.1} parent=11 // pred_check
          %p392 = pneg %p264
        $region46: #{tpu_custom_call.1} parent=11 // pred_check_branch
          %394 = sbr.rel (%p392) target = $region48
        $region47: #{tpu_custom_call.1} parent=11 // pred_region
          _
        $region48: #{tpu_custom_call.1} parent=11 // pred_fallthru
          _
        // Predicated region
        $region49: #{tpu_custom_call.1} parent=11 // pred_check
          %p395 = pneg %p285
        $region50: #{tpu_custom_call.1} parent=11 // pred_check_branch
          %397 = sbr.rel (%p395) target = $region52
        $region51: #{tpu_custom_call.1} parent=11 // pred_region
          _
        $region52: #{tpu_custom_call.1} parent=11 // pred_fallthru
          _
        // Predicated region
        $region53: #{tpu_custom_call.1} parent=11 // pred_check
          %p398 = pneg %p306
        $region54: #{tpu_custom_call.1} parent=11 // pred_check_branch
          %400 = sbr.rel (%p398) target = $region56
        $region55: #{tpu_custom_call.1} parent=11 // pred_region
          _
        $region56: #{tpu_custom_call.1} parent=11 // pred_fallthru
          _
        // Predicated region
        $region57: #{tpu_custom_call.1} parent=11 // pred_check
          %p401 = pneg %p327
        $region58: #{tpu_custom_call.1} parent=11 // pred_check_branch
          %403 = sbr.rel (%p401) target = $region60
        $region59: #{tpu_custom_call.1} parent=11 // pred_region
          _
        $region60: #{tpu_custom_call.1} parent=11 // pred_fallthru
          _
      $region12: #{tpu_custom_call.1} parent=5 // pred_fallthru
        _
      %p404 = scmp.lt.s32.totalorder %s23, 2
      // Predicated region
      $region61: #{tpu_custom_call.1} parent=5 // pred_check
        %p405 = pneg %p404
      $region62: #{tpu_custom_call.1} parent=5 // pred_check_branch
        %407 = sbr.rel (%p405) target = $region64
      $region63: #{tpu_custom_call.1} parent=5 // pred_region
        // Predicated region
        $region65: #{tpu_custom_call.1} parent=63 // pred_check
          %p408 = pneg %p43
        $region66: #{tpu_custom_call.1} parent=63 // pred_check_branch
          %410 = sbr.rel (%p408) target = $region68
        $region67: #{tpu_custom_call.1} parent=63 // pred_region
          %p411 = scmp.lt.s32.totalorder %s23, 1
          %s412 = scalar_select %p411, %s23, 1
          %s413 = smul.addr %s412, 2
          %s414 = smul.addr %s413, 8
          %s415 = scalar_lea.vmem %s0, %s414
        $region68: #{tpu_custom_call.1} parent=63 // pred_fallthru
          _
        // Predicated region
        $region69: #{tpu_custom_call.1} parent=63 // pred_check
          %p416 = pneg %p69
        $region70: #{tpu_custom_call.1} parent=63 // pred_check_branch
          %418 = sbr.rel (%p416) target = $region72
        $region71: #{tpu_custom_call.1} parent=63 // pred_region
          %p419 = scmp.lt.s32.totalorder %s23, 1
          %s420 = scalar_select %p419, %s23, 1
          %s421 = smul.addr %s420, 2
          %s422 = smul.addr %s421, 8
          %s423 = scalar_lea.vmem %s1, %s422
        $region72: #{tpu_custom_call.1} parent=63 // pred_fallthru
          _
      $region64: #{tpu_custom_call.1} parent=5 // pred_fallthru
        _
      %p424 = scmp.le.s32.totalorder 1, %s23
      %p425 = scmp.lt.s32.totalorder %s23, 3
      %p426 = pnand %p424, %p425
      %p427 = pneg %p426
      // Predicated region
      $region73: #{tpu_custom_call.1} parent=5 // pred_check
        _
      $region74: #{tpu_custom_call.1} parent=5 // pred_check_branch
        %429 = sbr.rel (%p426) target = $region76
      $region75: #{tpu_custom_call.1} parent=5 // pred_region
        %s430 = ssub.s32 %s23, 1
        %p431 = scmp.lt.s32.totalorder %s28, 1
        %s432 = scalar_select %p431, %s28, 1
        %s433 = smul.addr %s432, 2
        %s434 = smul.addr %s433, 8
        %s435 = scalar_lea.vmem %s0, %s434
        %p436 = pneg %p49
        %p437 = pneg %p46
        %p438 = scmp.lt.s32.totalorder %s28, 1
        %s439 = scalar_select %p438, %s28, 1
        %s440 = smul.addr %s439, 2
        %s441 = smul.addr %s440, 8
        %s442 = scalar_lea.vmem %s1, %s441
        %p443 = pneg %p75
        %p444 = pneg %p72
        %p445 = pneg %p96
        %p446 = pneg %p93
        %p447 = pneg %p117
        %p448 = pneg %p114
        %p449 = pneg %p138
        %p450 = pneg %p135
        %p451 = pneg %p159
        %p452 = pneg %p156
        %p453 = pneg %p180
        %p454 = pneg %p177
        %p455 = pneg %p201
        %p456 = pneg %p198
        %p457 = pneg %p222
        %p458 = pneg %p219
        %p459 = pneg %p243
        %p460 = pneg %p240
        %p461 = pneg %p264
        %p462 = pneg %p261
        %p463 = pneg %p285
        %p464 = pneg %p282
        %p465 = pneg %p306
        %p466 = pneg %p303
        %p467 = pneg %p327
        %p468 = pneg %p324
        %p469 = pneg %p353
        %p470 = pneg %p350
        %s471 = sand.u32 %s340, 1
        %s472 = scalar_lea.sflag [#allocation5], %s471
        %s473 = sand.u32 %s340, 1
        %s474 = smul.addr %s473, 8
        %s475 = scalar_lea.vmem [#allocation4], %s474
        %p476 = scmp.lt.s32.totalorder %s28, 1
        %s477 = scalar_select %p476, %s28, 1
        %s478 = smul.addr %s477, 2
        %s479 = smul.addr %s478, 8
        %s480 = scalar_lea.vmem %s0, %s479
        %p481 = scmp.lt.s32.totalorder %s28, 1
        %s482 = scalar_select %p481, %s28, 1
        %s483 = smul.addr %s482, 2
        %s484 = smul.addr %s483, 8
        %s485 = scalar_lea.vmem %s1, %s484
        %v487 = vld [vmem:[%s485] sm:$0xff]
        %v488 = vld [vmem:[%s485 + $0x8] sm:$0xff]
        %490 = vset.pattern.permute.xlu0 0
        %491 = vperm.xlu0 %490, %v487
        %v492 = vpop.permute.xlu0 %491
        %495 = vset.pattern.permute.xlu0 0
        %496 = vperm.xlu0 %495, %v488
        %v497 = vpop.permute.xlu0 %496
        %v499 = vld [vmem:[%s480] sm:$0xff]
        %v500 = vld [vmem:[%s480 + $0x8] sm:$0xff]
        %v501 = vmul.f32 %v499, %v492
        %v502 = vmul.f32 %v500, %v497
        %v503 = vpack.c.bf16 %v502, %v501
        %v504 = vld [vmem:[%s2] sm:$0xf]
        %v505 = vld [vmem:[%s3] sm:$0x1]
        %v507 = vlaneseq
        %v508 = vshrl.u32 %v507, 7
        %v509 = vsub.s32 0, %v508
        %v510 = vrot.slane %v505, %v509
        %vm512 = vcmask 64512
        %v514 = vsel %vm512, %v503, 0
        %vm516 = vcmask 1043456
        %v518 = vsel %vm516, %v504, 0
        %520 = vmatprep.subr.bf16.mxu0 0
        %521 = vmatpush1.bf16.msra.mxu0 %v518
        %522 = vmatprep.subr.bf16.mxu0 0
        %523 = vmatpush1.bf16.msra.mxu0 0
        %524 = vmatprep.subr.bf16.mxu0 0
        %525 = vmatpush1.bf16.msra.mxu0 0
        %526 = vmatprep.subr.bf16.mxu0 0
        %527 = vmatpush1.bf16.msra.mxu0 0
        %528 = vmatprep.subr.bf16.mxu0 0
        %529 = vmatpush1.bf16.msra.mxu0 0
        %530 = vmatprep.subr.bf16.mxu0 0
        %531 = vmatpush1.bf16.msra.mxu0 0
        %532 = vmatprep.subr.bf16.mxu0 0
        %533 = vmatpush1.bf16.msra.mxu0 0
        %534 = vmatprep.subr.bf16.mxu0 0
        %535 = vmatpush1.bf16.msra.mxu0 0
        %536 = vmatprep.subr.bf16.mxu0 0
        %537 = vmatpush1.bf16.msra.mxu0 0
        %538 = vmatprep.subr.bf16.mxu0 0
        %539 = vmatpush1.bf16.msra.mxu0 0
        %540 = vmatprep.subr.bf16.mxu0 0
        %541 = vmatpush1.bf16.msra.mxu0 0
        %542 = vmatprep.subr.bf16.mxu0 0
        %543 = vmatpush1.bf16.msra.mxu0 0
        %544 = vmatprep.subr.bf16.mxu0 0
        %545 = vmatpush1.bf16.msra.mxu0 0
        %546 = vmatprep.subr.bf16.mxu0 0
        %547 = vmatpush1.bf16.msra.mxu0 0
        %548 = vmatprep.subr.bf16.mxu0 0
        %549 = vmatpush1.bf16.msra.mxu0 0
        %550 = vmatprep.subr.bf16.mxu0 0
        %551 = vmatpush1.bf16.msra.mxu0 0
        %552 = vmatprep.mubr.bf16.mxu0 0
        %553 = vmatmul.mubr.bf16.gmra.mrb[0].mxu0 %v514
        %v554 = vpop.f32.mrb[0].mxu0
        %v555 = vadd.f32 %v510, %v554
        %v556 = vpop.f32.mrb[0].mxu0
        %v557 = vpop.f32.mrb[0].mxu0
        %v558 = vadd.f32 %v510, %v557
        %v559 = vpop.f32.mrb[0].mxu0
        %560 = vdwg.mxu0
        %v561 = vmul.f32 %v555, %v492
        %v562 = vmul.f32 %v558, %v497
        %vm563 = vcmask 261120
        %564 = vst.msk [vmem:[#allocation2] sm:$0xff] %vm563, 0.0
        %565 = vst.msk [vmem:[#allocation2 + $0x18] sm:$0xff] %vm563, 0.0
        %566 = vst.msk [vmem:[#allocation2 + $0x8] sm:$0xff] %vm563, %v561
        %567 = vst.msk [vmem:[#allocation2 + $0x10] sm:$0xff] %vm563, %v562
        %568 = vst.msk [vmem:[#allocation3] sm:$0xff] %vm563, 0.0
        %569 = vst.msk [vmem:[#allocation3 + $0x8] sm:$0xff] %vm563, 0.0
        %v570 = vld [vmem:[#allocation2 + $0x7] sm:$0xff]
        %v571 = vld [vmem:[#allocation2 + $0xf] sm:$0xff]
        %v572 = vld [vmem:[#allocation2 + $0x8] sm:$0xff]
        %v573 = vld [vmem:[#allocation2 + $0x10] sm:$0xff]
        %v574 = vld [vmem:[#allocation2 + $0x9] sm:$0xff]
        %v575 = vld [vmem:[#allocation2 + $0x11] sm:$0xff]
        %578 = vrot.lane.b32.xlu0 %v572, 32
        %v579 = vpop.permute.xlu0 %578
        %580 = vrot.lane.b32.xlu0 %v573, 32
        %v581 = vpop.permute.xlu0 %580
        %586 = vrot.lane.b32.xlu0 %v574, 64
        %v587 = vpop.permute.xlu0 %586
        %588 = vrot.lane.b32.xlu0 %v575, 64
        %v589 = vpop.permute.xlu0 %588
        %v592 = vsel %vm563, %v570, %v579
        %v593 = vsel %vm563, %v571, %v581
        %vm594 = vcmask 523264
        %v595 = vsel %vm594, %v592, %v587
        %v596 = vsel %vm594, %v593, %v589
        %v597 = vpack.c.bf16 %v596, %v595
        %v598 = vld [vmem:[%s4] sm:$0xf]
        %v599 = vld [vmem:[%s4 + $0x4] sm:$0xf]
        %v600 = vld [vmem:[%s4 + $0x8] sm:$0xf]
        %v601 = vld [vmem:[%s4 + $0xc] sm:$0xf]
        %v602 = vld [vmem:[%s4 + $0x10] sm:$0xf]
        %v603 = vld [vmem:[%s4 + $0x14] sm:$0xf]
        %v604 = vld [vmem:[%s4 + $0x18] sm:$0xf]
        %v605 = vld [vmem:[%s4 + $0x1c] sm:$0xf]
        %v606 = vld [vmem:[%s4 + $0x20] sm:$0xf]
        %v607 = vld [vmem:[%s4 + $0x24] sm:$0xf]
        %v608 = vld [vmem:[%s4 + $0x28] sm:$0xf]
        %v609 = vld [vmem:[%s4 + $0x2c] sm:$0xf]
        %v610 = vld [vmem:[%s5] sm:$0x1]
        %v611 = vlaneseq
        %v612 = vshrl.u32 %v611, 7
        %v613 = vsub.s32 0, %v612
        %v614 = vrot.slane %v610, %v613
        %v627 = vunpack.c.l.b16 %v598
        %v628 = vunpack.c.l.b16 %v599
        %v629 = vunpack.c.l.b16 %v600
        %v630 = vunpack.c.l.b16 %v601
        %v631 = vunpack.c.l.b16 %v602
        %v632 = vunpack.c.l.b16 %v603
        %v633 = vunpack.c.l.b16 %v604
        %v634 = vunpack.c.l.b16 %v605
        %v635 = vunpack.c.l.b16 %v606
        %v636 = vunpack.c.l.b16 %v607
        %v637 = vunpack.c.l.b16 %v608
        %v638 = vunpack.c.l.b16 %v609
        %v639 = vpack.c.b16 %v628, %v627
        %v640 = vpack.c.b16 %v630, %v629
        %v641 = vpack.c.b16 %v632, %v631
        %v642 = vpack.c.b16 %v634, %v633
        %v643 = vpack.c.b16 %v636, %v635
        %v644 = vpack.c.b16 %v638, %v637
        %vm651 = vcmask 785408
        %v653 = vsel %vm651, %v597, 0
        %655 = vmatprep.subr.bf16.mxu0 0
        %656 = vmatpush1.bf16.msra.mxu0 %v639
        %657 = vmatprep.subr.bf16.mxu0 0
        %658 = vmatpush1.bf16.msra.mxu0 %v640
        %659 = vmatprep.subr.bf16.mxu0 0
        %660 = vmatpush1.bf16.msra.mxu0 %v641
        %661 = vmatprep.subr.bf16.mxu0 0
        %662 = vmatpush1.bf16.msra.mxu0 %v642
        %663 = vmatprep.subr.bf16.mxu0 0
        %664 = vmatpush1.bf16.msra.mxu0 %v643
        %665 = vmatprep.subr.bf16.mxu0 0
        %666 = vmatpush1.bf16.msra.mxu0 %v644
        %667 = vmatprep.subr.bf16.mxu0 0
        %668 = vmatpush1.bf16.msra.mxu0 0
        %669 = vmatprep.subr.bf16.mxu0 0
        %670 = vmatpush1.bf16.msra.mxu0 0
        %671 = vmatprep.subr.bf16.mxu0 0
        %672 = vmatpush1.bf16.msra.mxu0 0
        %673 = vmatprep.subr.bf16.mxu0 0
        %674 = vmatpush1.bf16.msra.mxu0 0
        %675 = vmatprep.subr.bf16.mxu0 0
        %676 = vmatpush1.bf16.msra.mxu0 0
        %677 = vmatprep.subr.bf16.mxu0 0
        %678 = vmatpush1.bf16.msra.mxu0 0
        %679 = vmatprep.subr.bf16.mxu0 0
        %680 = vmatpush1.bf16.msra.mxu0 0
        %681 = vmatprep.subr.bf16.mxu0 0
        %682 = vmatpush1.bf16.msra.mxu0 0
        %683 = vmatprep.subr.bf16.mxu0 0
        %684 = vmatpush1.bf16.msra.mxu0 0
        %685 = vmatprep.subr.bf16.mxu0 0
        %686 = vmatpush1.bf16.msra.mxu0 0
        %687 = vmatprep.mubr.bf16.mxu0 0
        %688 = vmatmul.mubr.bf16.gmra.mrb[0].mxu0 %v653
        %v689 = vpop.f32.mrb[0].mxu0
        %v690 = vadd.f32 %v614, %v689
        %v691 = vpop.f32.mrb[0].mxu0
        %v692 = vpop.f32.mrb[0].mxu0
        %v693 = vadd.f32 %v614, %v692
        %v694 = vpop.f32.mrb[0].mxu0
        %695 = vdwg.mxu0
        %v696 = vld [vmem:[%s6] sm:$0xf]
        %v697 = vld [vmem:[%s6 + $0x4] sm:$0xf]
        %v698 = vld [vmem:[%s6 + $0x8] sm:$0xf]
        %v699 = vld [vmem:[%s6 + $0xc] sm:$0xf]
        %v700 = vld [vmem:[%s6 + $0x10] sm:$0xf]
        %v701 = vld [vmem:[%s6 + $0x14] sm:$0xf]
        %v702 = vld [vmem:[%s6 + $0x18] sm:$0xf]
        %v703 = vld [vmem:[%s6 + $0x1c] sm:$0xf]
        %v704 = vld [vmem:[%s6 + $0x20] sm:$0xf]
        %v705 = vld [vmem:[%s6 + $0x24] sm:$0xf]
        %v706 = vld [vmem:[%s6 + $0x28] sm:$0xf]
        %v707 = vld [vmem:[%s6 + $0x2c] sm:$0xf]
        %v708 = vld [vmem:[%s7] sm:$0x1]
        %v709 = vlaneseq
        %v710 = vshrl.u32 %v709, 7
        %v711 = vsub.s32 0, %v710
        %v712 = vrot.slane %v708, %v711
        %v725 = vunpack.c.l.b16 %v696
        %v726 = vunpack.c.l.b16 %v697
        %v727 = vunpack.c.l.b16 %v698
        %v728 = vunpack.c.l.b16 %v699
        %v729 = vunpack.c.l.b16 %v700
        %v730 = vunpack.c.l.b16 %v701
        %v731 = vunpack.c.l.b16 %v702
        %v732 = vunpack.c.l.b16 %v703
        %v733 = vunpack.c.l.b16 %v704
        %v734 = vunpack.c.l.b16 %v705
        %v735 = vunpack.c.l.b16 %v706
        %v736 = vunpack.c.l.b16 %v707
        %v737 = vpack.c.b16 %v726, %v725
        %v738 = vpack.c.b16 %v728, %v727
        %v739 = vpack.c.b16 %v730, %v729
        %v740 = vpack.c.b16 %v732, %v731
        %v741 = vpack.c.b16 %v734, %v733
        %v742 = vpack.c.b16 %v736, %v735
        %749 = vmatprep.subr.bf16.mxu0 0
        %750 = vmatpush1.bf16.msra.mxu0 %v737
        %751 = vmatprep.subr.bf16.mxu0 0
        %752 = vmatpush1.bf16.msra.mxu0 %v738
        %753 = vmatprep.subr.bf16.mxu0 0
        %754 = vmatpush1.bf16.msra.mxu0 %v739
        %755 = vmatprep.subr.bf16.mxu0 0
        %756 = vmatpush1.bf16.msra.mxu0 %v740
        %757 = vmatprep.subr.bf16.mxu0 0
        %758 = vmatpush1.bf16.msra.mxu0 %v741
        %759 = vmatprep.subr.bf16.mxu0 0
        %760 = vmatpush1.bf16.msra.mxu0 %v742
        %761 = vmatprep.subr.bf16.mxu0 0
        %762 = vmatpush1.bf16.msra.mxu0 0
        %763 = vmatprep.subr.bf16.mxu0 0
        %764 = vmatpush1.bf16.msra.mxu0 0
        %765 = vmatprep.subr.bf16.mxu0 0
        %766 = vmatpush1.bf16.msra.mxu0 0
        %767 = vmatprep.subr.bf16.mxu0 0
        %768 = vmatpush1.bf16.msra.mxu0 0
        %769 = vmatprep.subr.bf16.mxu0 0
        %770 = vmatpush1.bf16.msra.mxu0 0
        %771 = vmatprep.subr.bf16.mxu0 0
        %772 = vmatpush1.bf16.msra.mxu0 0
        %773 = vmatprep.subr.bf16.mxu0 0
        %774 = vmatpush1.bf16.msra.mxu0 0
        %775 = vmatprep.subr.bf16.mxu0 0
        %776 = vmatpush1.bf16.msra.mxu0 0
        %777 = vmatprep.subr.bf16.mxu0 0
        %778 = vmatpush1.bf16.msra.mxu0 0
        %779 = vmatprep.subr.bf16.mxu0 0
        %780 = vmatpush1.bf16.msra.mxu0 0
        %781 = vmatprep.mubr.bf16.mxu0 0
        %782 = vmatmul.mubr.bf16.gmra.mrb[0].mxu0 %v653
        %v783 = vpop.f32.mrb[0].mxu0
        %v784 = vadd.f32 %v712, %v783
        %v785 = vpop.f32.mrb[0].mxu0
        %v786 = vpop.f32.mrb[0].mxu0
        %v787 = vadd.f32 %v712, %v786
        %v788 = vpop.f32.mrb[0].mxu0
        %789 = vdwg.mxu0
        %v790 = vtanh.pop %v690
        %v791 = vtanh.pop %v693
        %v792 = vxor.u32 %v784, 2147483648
        %v793 = vxor.u32 %v787, 2147483648
        %v794 = vmul.f32 %v792, 1.442695
        %v795 = vpow.pop %v794
        %v796 = vmul.f32 %v793, 1.442695
        %v797 = vpow.pop %v796
        %v798 = vadd.f32 %v795, 1.0
        %v799 = vadd.f32 %v797, 1.0
        %v800 = vrcp.pop %v798
        %v801 = vmul.f32 1.0, %v800
        %v802 = vrcp.pop %v799
        %v803 = vmul.f32 1.0, %v802
        %v804 = vmul.f32 %v790, %v801
        %v805 = vmul.f32 %v791, %v803
        %v806 = vpack.c.bf16 %v805, %v804
        %v807 = vld [vmem:[#allocation3] sm:$0xff]
        %v808 = vld [vmem:[#allocation3 + $0x8] sm:$0xff]
        %v809 = vld [vmem:[%s10] sm:$0xf]
        %v810 = vld [vmem:[%s10 + $0x4] sm:$0xf]
        %v811 = vld [vmem:[%s10 + $0x8] sm:$0xf]
        %v812 = vld [vmem:[%s10 + $0xc] sm:$0xf]
        %v817 = vunpack.c.l.b16 %v809
        %v818 = vunpack.c.l.b16 %v810
        %v819 = vunpack.c.l.b16 %v811
        %v820 = vunpack.c.l.b16 %v812
        %v821 = vpack.c.b16 %v818, %v817
        %v822 = vpack.c.b16 %v820, %v819
        %v826 = vsel %vm563, %v806, 0
        %828 = vmatprep.subr.bf16.mxu0 0
        %829 = vmatpush1.bf16.msra.mxu0 %v821
        %830 = vmatprep.subr.bf16.mxu0 0
        %831 = vmatpush1.bf16.msra.mxu0 %v822
        %832 = vmatprep.subr.bf16.mxu0 0
        %833 = vmatpush1.bf16.msra.mxu0 0
        %834 = vmatprep.subr.bf16.mxu0 0
        %835 = vmatpush1.bf16.msra.mxu0 0
        %836 = vmatprep.subr.bf16.mxu0 0
        %837 = vmatpush1.bf16.msra.mxu0 0
        %838 = vmatprep.subr.bf16.mxu0 0
        %839 = vmatpush1.bf16.msra.mxu0 0
        %840 = vmatprep.subr.bf16.mxu0 0
        %841 = vmatpush1.bf16.msra.mxu0 0
        %842 = vmatprep.subr.bf16.mxu0 0
        %843 = vmatpush1.bf16.msra.mxu0 0
        %844 = vmatprep.subr.bf16.mxu0 0
        %845 = vmatpush1.bf16.msra.mxu0 0
        %846 = vmatprep.subr.bf16.mxu0 0
        %847 = vmatpush1.bf16.msra.mxu0 0
        %848 = vmatprep.subr.bf16.mxu0 0
        %849 = vmatpush1.bf16.msra.mxu0 0
        %850 = vmatprep.subr.bf16.mxu0 0
        %851 = vmatpush1.bf16.msra.mxu0 0
        %852 = vmatprep.subr.bf16.mxu0 0
        %853 = vmatpush1.bf16.msra.mxu0 0
        %854 = vmatprep.subr.bf16.mxu0 0
        %855 = vmatpush1.bf16.msra.mxu0 0
        %856 = vmatprep.subr.bf16.mxu0 0
        %857 = vmatpush1.bf16.msra.mxu0 0
        %858 = vmatprep.subr.bf16.mxu0 0
        %859 = vmatpush1.bf16.msra.mxu0 0
        %860 = vmatprep.mubr.bf16.mxu0 0
        %861 = vmatmul.mubr.bf16.gmra.mrb[0].mxu0 %v826
        %v862 = vpop.f32.mrb[0].mxu0
        %v863 = vadd.f32 0.0, %v862
        %v864 = vpop.f32.mrb[0].mxu0
        %v865 = vpop.f32.mrb[0].mxu0
        %v866 = vadd.f32 0.0, %v865
        %v867 = vpop.f32.mrb[0].mxu0
        %868 = vdwg.mxu0
        %v869 = vadd.f32 %v807, %v863
        %v870 = vadd.f32 %v808, %v866
        %871 = vst.msk [vmem:[#allocation3] sm:$0xff] %vm563, %v869
        %872 = vst.msk [vmem:[#allocation3 + $0x8] sm:$0xff] %vm563, %v870
        %v873 = vld [vmem:[%s8] sm:$0xf]
        %v874 = vld [vmem:[%s8 + $0x4] sm:$0xf]
        %v875 = vld [vmem:[%s8 + $0x8] sm:$0xf]
        %v876 = vld [vmem:[%s8 + $0xc] sm:$0xf]
        %v877 = vld [vmem:[%s9] sm:$0x1]
        %v878 = vlaneseq
        %v879 = vshrl.u32 %v878, 7
        %v880 = vsub.s32 0, %v879
        %v881 = vrot.slane %v877, %v880
        %v886 = vunpack.c.l.b16 %v873
        %v887 = vunpack.c.l.b16 %v874
        %v888 = vunpack.c.l.b16 %v875
        %v889 = vunpack.c.l.b16 %v876
        %v890 = vpack.c.b16 %v887, %v886
        %v891 = vpack.c.b16 %v889, %v888
        %894 = vmatprep.subr.bf16.mxu0 0
        %895 = vmatpush1.bf16.msra.mxu0 %v890
        %896 = vmatprep.subr.bf16.mxu0 0
        %897 = vmatpush1.bf16.msra.mxu0 %v891
        %898 = vmatprep.subr.bf16.mxu0 0
        %899 = vmatpush1.bf16.msra.mxu0 0
        %900 = vmatprep.subr.bf16.mxu0 0
        %901 = vmatpush1.bf16.msra.mxu0 0
        %902 = vmatprep.subr.bf16.mxu0 0
        %903 = vmatpush1.bf16.msra.mxu0 0
        %904 = vmatprep.subr.bf16.mxu0 0
        %905 = vmatpush1.bf16.msra.mxu0 0
        %906 = vmatprep.subr.bf16.mxu0 0
        %907 = vmatpush1.bf16.msra.mxu0 0
        %908 = vmatprep.subr.bf16.mxu0 0
        %909 = vmatpush1.bf16.msra.mxu0 0
        %910 = vmatprep.subr.bf16.mxu0 0
        %911 = vmatpush1.bf16.msra.mxu0 0
        %912 = vmatprep.subr.bf16.mxu0 0
        %913 = vmatpush1.bf16.msra.mxu0 0
        %914 = vmatprep.subr.bf16.mxu0 0
        %915 = vmatpush1.bf16.msra.mxu0 0
        %916 = vmatprep.subr.bf16.mxu0 0
        %917 = vmatpush1.bf16.msra.mxu0 0
        %918 = vmatprep.subr.bf16.mxu0 0
        %919 = vmatpush1.bf16.msra.mxu0 0
        %920 = vmatprep.subr.bf16.mxu0 0
        %921 = vmatpush1.bf16.msra.mxu0 0
        %922 = vmatprep.subr.bf16.mxu0 0
        %923 = vmatpush1.bf16.msra.mxu0 0
        %924 = vmatprep.subr.bf16.mxu0 0
        %925 = vmatpush1.bf16.msra.mxu0 0
        %926 = vmatprep.mubr.bf16.mxu0 0
        %927 = vmatmul.mubr.bf16.gmra.mrb[0].mxu0 %v826
        %v928 = vpop.f32.mrb[0].mxu0
        %v929 = vadd.f32 %v881, %v928
        %v930 = vpop.f32.mrb[0].mxu0
        %v931 = vpop.f32.mrb[0].mxu0
        %v932 = vadd.f32 %v881, %v931
        %v933 = vpop.f32.mrb[0].mxu0
        %934 = vdwg.mxu0
        %v935 = vld [vmem:[#allocation2 + $0x8] sm:$0xff]
        %v936 = vld [vmem:[#allocation2 + $0x10] sm:$0xff]
        %v937 = vadd.f32 %v935, %v929
        %v938 = vadd.f32 %v936, %v932
        %v939 = vmul.f32 %v937, %v492
        %v940 = vmul.f32 %v938, %v497
        %941 = vst.msk [vmem:[#allocation2 + $0x8] sm:$0xff] %vm563, %v939
        %942 = vst.msk [vmem:[#allocation2 + $0x10] sm:$0xff] %vm563, %v940
        %v943 = vld [vmem:[#allocation2 + $0x6] sm:$0xff]
        %v944 = vld [vmem:[#allocation2 + $0xe] sm:$0xff]
        %v945 = vld [vmem:[#allocation2 + $0x8] sm:$0xff]
        %v946 = vld [vmem:[#allocation2 + $0x10] sm:$0xff]
        %v947 = vld [vmem:[#allocation2 + $0xa] sm:$0xff]
        %v948 = vld [vmem:[#allocation2 + $0x12] sm:$0xff]
        %951 = vrot.lane.b32.xlu0 %v945, 32
        %v952 = vpop.permute.xlu0 %951
        %953 = vrot.lane.b32.xlu0 %v946, 32
        %v954 = vpop.permute.xlu0 %953
        %959 = vrot.lane.b32.xlu0 %v947, 64
        %v960 = vpop.permute.xlu0 %959
        %961 = vrot.lane.b32.xlu0 %v948, 64
        %v962 = vpop.permute.xlu0 %961
        %v965 = vsel %vm563, %v943, %v952
        %v966 = vsel %vm563, %v944, %v954
        %v967 = vsel %vm594, %v965, %v960
        %v968 = vsel %vm594, %v966, %v962
        %v969 = vpack.c.bf16 %v968, %v967
        %s970 = scalar_lea.vmem %s4, 48
        %v971 = vld [vmem:[%s970] sm:$0xf]
        %v972 = vld [vmem:[%s970 + $0x4] sm:$0xf]
        %v973 = vld [vmem:[%s970 + $0x8] sm:$0xf]
        %v974 = vld [vmem:[%s970 + $0xc] sm:$0xf]
        %v975 = vld [vmem:[%s970 + $0x10] sm:$0xf]
        %v976 = vld [vmem:[%s970 + $0x14] sm:$0xf]
        %v977 = vld [vmem:[%s970 + $0x18] sm:$0xf]
        %v978 = vld [vmem:[%s970 + $0x1c] sm:$0xf]
        %v979 = vld [vmem:[%s970 + $0x20] sm:$0xf]
        %v980 = vld [vmem:[%s970 + $0x24] sm:$0xf]
        %v981 = vld [vmem:[%s970 + $0x28] sm:$0xf]
        %v982 = vld [vmem:[%s970 + $0x2c] sm:$0xf]
        %v983 = vld [vmem:[%s5 + $0x1] sm:$0x1]
        %v984 = vlaneseq
        %v985 = vshrl.u32 %v984, 7
        %v986 = vsub.s32 0, %v985
        %v987 = vrot.slane %v983, %v986
        %v1000 = vunpack.c.l.b16 %v971
        %v1001 = vunpack.c.l.b16 %v972
        %v1002 = vunpack.c.l.b16 %v973
        %v1003 = vunpack.c.l.b16 %v974
        %v1004 = vunpack.c.l.b16 %v975
        %v1005 = vunpack.c.l.b16 %v976
        %v1006 = vunpack.c.l.b16 %v977
        %v1007 = vunpack.c.l.b16 %v978
        %v1008 = vunpack.c.l.b16 %v979
        %v1009 = vunpack.c.l.b16 %v980
        %v1010 = vunpack.c.l.b16 %v981
        %v1011 = vunpack.c.l.b16 %v982
        %v1012 = vpack.c.b16 %v1001, %v1000
        %v1013 = vpack.c.b16 %v1003, %v1002
        %v1014 = vpack.c.b16 %v1005, %v1004
        %v1015 = vpack.c.b16 %v1007, %v1006
        %v1016 = vpack.c.b16 %v1009, %v1008
        %v1017 = vpack.c.b16 %v1011, %v1010
        %v1025 = vsel %vm651, %v969, 0
        %1027 = vmatprep.subr.bf16.mxu0 0
        %1028 = vmatpush1.bf16.msra.mxu0 %v1012
        %1029 = vmatprep.subr.bf16.mxu0 0
        %1030 = vmatpush1.bf16.msra.mxu0 %v1013
        %1031 = vmatprep.subr.bf16.mxu0 0
        %1032 = vmatpush1.bf16.msra.mxu0 %v1014
        %1033 = vmatprep.subr.bf16.mxu0 0
        %1034 = vmatpush1.bf16.msra.mxu0 %v1015
        %1035 = vmatprep.subr.bf16.mxu0 0
        %1036 = vmatpush1.bf16.msra.mxu0 %v1016
        %1037 = vmatprep.subr.bf16.mxu0 0
        %1038 = vmatpush1.bf16.msra.mxu0 %v1017
        %1039 = vmatprep.subr.bf16.mxu0 0
        %1040 = vmatpush1.bf16.msra.mxu0 0
        %1041 = vmatprep.subr.bf16.mxu0 0
        %1042 = vmatpush1.bf16.msra.mxu0 0
        %1043 = vmatprep.subr.bf16.mxu0 0
        %1044 = vmatpush1.bf16.msra.mxu0 0
        %1045 = vmatprep.subr.bf16.mxu0 0
        %1046 = vmatpush1.bf16.msra.mxu0 0
        %1047 = vmatprep.subr.bf16.mxu0 0
        %1048 = vmatpush1.bf16.msra.mxu0 0
        %1049 = vmatprep.subr.bf16.mxu0 0
        %1050 = vmatpush1.bf16.msra.mxu0 0
        %1051 = vmatprep.subr.bf16.mxu0 0
        %1052 = vmatpush1.bf16.msra.mxu0 0
        %1053 = vmatprep.subr.bf16.mxu0 0
        %1054 = vmatpush1.bf16.msra.mxu0 0
        %1055 = vmatprep.subr.bf16.mxu0 0
        %1056 = vmatpush1.bf16.msra.mxu0 0
        %1057 = vmatprep.subr.bf16.mxu0 0
        %1058 = vmatpush1.bf16.msra.mxu0 0
        %1059 = vmatprep.mubr.bf16.mxu0 0
        %1060 = vmatmul.mubr.bf16.gmra.mrb[0].mxu0 %v1025
        %v1061 = vpop.f32.mrb[0].mxu0
        %v1062 = vadd.f32 %v987, %v1061
        %v1063 = vpop.f32.mrb[0].mxu0
        %v1064 = vpop.f32.mrb[0].mxu0
        %v1065 = vadd.f32 %v987, %v1064
        %v1066 = vpop.f32.mrb[0].mxu0
        %1067 = vdwg.mxu0
        %s1068 = scalar_lea.vmem %s6, 48
        %v1069 = vld [vmem:[%s1068] sm:$0xf]
        %v1070 = vld [vmem:[%s1068 + $0x4] sm:$0xf]
        %v1071 = vld [vmem:[%s1068 + $0x8] sm:$0xf]
        %v1072 = vld [vmem:[%s1068 + $0xc] sm:$0xf]
        %v1073 = vld [vmem:[%s1068 + $0x10] sm:$0xf]
        %v1074 = vld [vmem:[%s1068 + $0x14] sm:$0xf]
        %v1075 = vld [vmem:[%s1068 + $0x18] sm:$0xf]
        %v1076 = vld [vmem:[%s1068 + $0x1c] sm:$0xf]
        %v1077 = vld [vmem:[%s1068 + $0x20] sm:$0xf]
        %v1078 = vld [vmem:[%s1068 + $0x24] sm:$0xf]
        %v1079 = vld [vmem:[%s1068 + $0x28] sm:$0xf]
        %v1080 = vld [vmem:[%s1068 + $0x2c] sm:$0xf]
        %v1081 = vld [vmem:[%s7 + $0x1] sm:$0x1]
        %v1082 = vlaneseq
        %v1083 = vshrl.u32 %v1082, 7
        %v1084 = vsub.s32 0, %v1083
        %v1085 = vrot.slane %v1081, %v1084
        %v1098 = vunpack.c.l.b16 %v1069
        %v1099 = vunpack.c.l.b16 %v1070
        %v1100 = vunpack.c.l.b16 %v1071
        %v1101 = vunpack.c.l.b16 %v1072
        %v1102 = vunpack.c.l.b16 %v1073
        %v1103 = vunpack.c.l.b16 %v1074
        %v1104 = vunpack.c.l.b16 %v1075
        %v1105 = vunpack.c.l.b16 %v1076
        %v1106 = vunpack.c.l.b16 %v1077
        %v1107 = vunpack.c.l.b16 %v1078
        %v1108 = vunpack.c.l.b16 %v1079
        %v1109 = vunpack.c.l.b16 %v1080
        %v1110 = vpack.c.b16 %v1099, %v1098
        %v1111 = vpack.c.b16 %v1101, %v1100
        %v1112 = vpack.c.b16 %v1103, %v1102
        %v1113 = vpack.c.b16 %v1105, %v1104
        %v1114 = vpack.c.b16 %v1107, %v1106
        %v1115 = vpack.c.b16 %v1109, %v1108
        %1122 = vmatprep.subr.bf16.mxu0 0
        %1123 = vmatpush1.bf16.msra.mxu0 %v1110
        %1124 = vmatprep.subr.bf16.mxu0 0
        %1125 = vmatpush1.bf16.msra.mxu0 %v1111
        %1126 = vmatprep.subr.bf16.mxu0 0
        %1127 = vmatpush1.bf16.msra.mxu0 %v1112
        %1128 = vmatprep.subr.bf16.mxu0 0
        %1129 = vmatpush1.bf16.msra.mxu0 %v1113
        %1130 = vmatprep.subr.bf16.mxu0 0
        %1131 = vmatpush1.bf16.msra.mxu0 %v1114
        %1132 = vmatprep.subr.bf16.mxu0 0
        %1133 = vmatpush1.bf16.msra.mxu0 %v1115
        %1134 = vmatprep.subr.bf16.mxu0 0
        %1135 = vmatpush1.bf16.msra.mxu0 0
        %1136 = vmatprep.subr.bf16.mxu0 0
        %1137 = vmatpush1.bf16.msra.mxu0 0
        %1138 = vmatprep.subr.bf16.mxu0 0
        %1139 = vmatpush1.bf16.msra.mxu0 0
        %1140 = vmatprep.subr.bf16.mxu0 0
        %1141 = vmatpush1.bf16.msra.mxu0 0
        %1142 = vmatprep.subr.bf16.mxu0 0
        %1143 = vmatpush1.bf16.msra.mxu0 0
        %1144 = vmatprep.subr.bf16.mxu0 0
        %1145 = vmatpush1.bf16.msra.mxu0 0
        %1146 = vmatprep.subr.bf16.mxu0 0
        %1147 = vmatpush1.bf16.msra.mxu0 0
        %1148 = vmatprep.subr.bf16.mxu0 0
        %1149 = vmatpush1.bf16.msra.mxu0 0
        %1150 = vmatprep.subr.bf16.mxu0 0
        %1151 = vmatpush1.bf16.msra.mxu0 0
        %1152 = vmatprep.subr.bf16.mxu0 0
        %1153 = vmatpush1.bf16.msra.mxu0 0
        %1154 = vmatprep.mubr.bf16.mxu0 0
        %1155 = vmatmul.mubr.bf16.gmra.mrb[0].mxu0 %v1025
        %v1156 = vpop.f32.mrb[0].mxu0
        %v1157 = vadd.f32 %v1085, %v1156
        %v1158 = vpop.f32.mrb[0].mxu0
        %v1159 = vpop.f32.mrb[0].mxu0
        %v1160 = vadd.f32 %v1085, %v1159
        %v1161 = vpop.f32.mrb[0].mxu0
        %1162 = vdwg.mxu0
        %v1163 = vtanh.pop %v1062
        %v1164 = vtanh.pop %v1065
        %v1165 = vxor.u32 %v1157, 2147483648
        %v1166 = vxor.u32 %v1160, 2147483648
        %v1167 = vmul.f32 %v1165, 1.442695
        %v1168 = vpow.pop %v1167
        %v1169 = vmul.f32 %v1166, 1.442695
        %v1170 = vpow.pop %v1169
        %v1171 = vadd.f32 %v1168, 1.0
        %v1172 = vadd.f32 %v1170, 1.0
        %v1173 = vrcp.pop %v1171
        %v1174 = vmul.f32 1.0, %v1173
        %v1175 = vrcp.pop %v1172
        %v1176 = vmul.f32 1.0, %v1175
        %v1177 = vmul.f32 %v1163, %v1174
        %v1178 = vmul.f32 %v1164, %v1176
        %v1179 = vpack.c.bf16 %v1178, %v1177
        %v1180 = vld [vmem:[#allocation3] sm:$0xff]
        %v1181 = vld [vmem:[#allocation3 + $0x8] sm:$0xff]
        %s1182 = scalar_lea.vmem %s10, 16
        %v1183 = vld [vmem:[%s1182] sm:$0xf]
        %v1184 = vld [vmem:[%s1182 + $0x4] sm:$0xf]
        %v1185 = vld [vmem:[%s1182 + $0x8] sm:$0xf]
        %v1186 = vld [vmem:[%s1182 + $0xc] sm:$0xf]
        %v1191 = vunpack.c.l.b16 %v1183
        %v1192 = vunpack.c.l.b16 %v1184
        %v1193 = vunpack.c.l.b16 %v1185
        %v1194 = vunpack.c.l.b16 %v1186
        %v1195 = vpack.c.b16 %v1192, %v1191
        %v1196 = vpack.c.b16 %v1194, %v1193
        %v1200 = vsel %vm563, %v1179, 0
        %1202 = vmatprep.subr.bf16.mxu0 0
        %1203 = vmatpush1.bf16.msra.mxu0 %v1195
        %1204 = vmatprep.subr.bf16.mxu0 0
        %1205 = vmatpush1.bf16.msra.mxu0 %v1196
        %1206 = vmatprep.subr.bf16.mxu0 0
        %1207 = vmatpush1.bf16.msra.mxu0 0
        %1208 = vmatprep.subr.bf16.mxu0 0
        %1209 = vmatpush1.bf16.msra.mxu0 0
        %1210 = vmatprep.subr.bf16.mxu0 0
        %1211 = vmatpush1.bf16.msra.mxu0 0
        %1212 = vmatprep.subr.bf16.mxu0 0
        %1213 = vmatpush1.bf16.msra.mxu0 0
        %1214 = vmatprep.subr.bf16.mxu0 0
        %1215 = vmatpush1.bf16.msra.mxu0 0
        %1216 = vmatprep.subr.bf16.mxu0 0
        %1217 = vmatpush1.bf16.msra.mxu0 0
        %1218 = vmatprep.subr.bf16.mxu0 0
        %1219 = vmatpush1.bf16.msra.mxu0 0
        %1220 = vmatprep.subr.bf16.mxu0 0
        %1221 = vmatpush1.bf16.msra.mxu0 0
        %1222 = vmatprep.subr.bf16.mxu0 0
        %1223 = vmatpush1.bf16.msra.mxu0 0
        %1224 = vmatprep.subr.bf16.mxu0 0
        %1225 = vmatpush1.bf16.msra.mxu0 0
        %1226 = vmatprep.subr.bf16.mxu0 0
        %1227 = vmatpush1.bf16.msra.mxu0 0
        %1228 = vmatprep.subr.bf16.mxu0 0
        %1229 = vmatpush1.bf16.msra.mxu0 0
        %1230 = vmatprep.subr.bf16.mxu0 0
        %1231 = vmatpush1.bf16.msra.mxu0 0
        %1232 = vmatprep.subr.bf16.mxu0 0
        %1233 = vmatpush1.bf16.msra.mxu0 0
        %1234 = vmatprep.mubr.bf16.mxu0 0
        %1235 = vmatmul.mubr.bf16.gmra.mrb[0].mxu0 %v1200
        %v1236 = vpop.f32.mrb[0].mxu0
        %v1237 = vadd.f32 0.0, %v1236
        %v1238 = vpop.f32.mrb[0].mxu0
        %v1239 = vpop.f32.mrb[0].mxu0
        %v1240 = vadd.f32 0.0, %v1239
        %v1241 = vpop.f32.mrb[0].mxu0
        %1242 = vdwg.mxu0
        %v1243 = vadd.f32 %v1180, %v1237
        %v1244 = vadd.f32 %v1181, %v1240
        %1245 = vst.msk [vmem:[#allocation3] sm:$0xff] %vm563, %v1243
        %1246 = vst.msk [vmem:[#allocation3 + $0x8] sm:$0xff] %vm563, %v1244
        %s1247 = scalar_lea.vmem %s8, 16
        %v1248 = vld [vmem:[%s1247] sm:$0xf]
        %v1249 = vld [vmem:[%s1247 + $0x4] sm:$0xf]
        %v1250 = vld [vmem:[%s1247 + $0x8] sm:$0xf]
        %v1251 = vld [vmem:[%s1247 + $0xc] sm:$0xf]
        %v1252 = vld [vmem:[%s9 + $0x1] sm:$0x1]
        %v1253 = vlaneseq
        %v1254 = vshrl.u32 %v1253, 7
        %v1255 = vsub.s32 0, %v1254
        %v1256 = vrot.slane %v1252, %v1255
        %v1261 = vunpack.c.l.b16 %v1248
        %v1262 = vunpack.c.l.b16 %v1249
        %v1263 = vunpack.c.l.b16 %v1250
        %v1264 = vunpack.c.l.b16 %v1251
        %v1265 = vpack.c.b16 %v1262, %v1261
        %v1266 = vpack.c.b16 %v1264, %v1263
        %1269 = vmatprep.subr.bf16.mxu0 0
        %1270 = vmatpush1.bf16.msra.mxu0 %v1265
        %1271 = vmatprep.subr.bf16.mxu0 0
        %1272 = vmatpush1.bf16.msra.mxu0 %v1266
        %1273 = vmatprep.subr.bf16.mxu0 0
        %1274 = vmatpush1.bf16.msra.mxu0 0
        %1275 = vmatprep.subr.bf16.mxu0 0
        %1276 = vmatpush1.bf16.msra.mxu0 0
        %1277 = vmatprep.subr.bf16.mxu0 0
        %1278 = vmatpush1.bf16.msra.mxu0 0
        %1279 = vmatprep.subr.bf16.mxu0 0
        %1280 = vmatpush1.bf16.msra.mxu0 0
        %1281 = vmatprep.subr.bf16.mxu0 0
        %1282 = vmatpush1.bf16.msra.mxu0 0
        %1283 = vmatprep.subr.bf16.mxu0 0
        %1284 = vmatpush1.bf16.msra.mxu0 0
        %1285 = vmatprep.subr.bf16.mxu0 0
        %1286 = vmatpush1.bf16.msra.mxu0 0
        %1287 = vmatprep.subr.bf16.mxu0 0
        %1288 = vmatpush1.bf16.msra.mxu0 0
        %1289 = vmatprep.subr.bf16.mxu0 0
        %1290 = vmatpush1.bf16.msra.mxu0 0
        %1291 = vmatprep.subr.bf16.mxu0 0
        %1292 = vmatpush1.bf16.msra.mxu0 0
        %1293 = vmatprep.subr.bf16.mxu0 0
        %1294 = vmatpush1.bf16.msra.mxu0 0
        %1295 = vmatprep.subr.bf16.mxu0 0
        %1296 = vmatpush1.bf16.msra.mxu0 0
        %1297 = vmatprep.subr.bf16.mxu0 0
        %1298 = vmatpush1.bf16.msra.mxu0 0
        %1299 = vmatprep.subr.bf16.mxu0 0
        %1300 = vmatpush1.bf16.msra.mxu0 0
        %1301 = vmatprep.mubr.bf16.mxu0 0
        %1302 = vmatmul.mubr.bf16.gmra.mrb[0].mxu0 %v1200
        %v1303 = vpop.f32.mrb[0].mxu0
        %v1304 = vadd.f32 %v1256, %v1303
        %v1305 = vpop.f32.mrb[0].mxu0
        %v1306 = vpop.f32.mrb[0].mxu0
        %v1307 = vadd.f32 %v1256, %v1306
        %v1308 = vpop.f32.mrb[0].mxu0
        %1309 = vdwg.mxu0
        %v1310 = vld [vmem:[#allocation2 + $0x8] sm:$0xff]
        %v1311 = vld [vmem:[#allocation2 + $0x10] sm:$0xff]
        %v1312 = vadd.f32 %v1310, %v1304
        %v1313 = vadd.f32 %v1311, %v1307
        %v1314 = vmul.f32 %v1312, %v492
        %v1315 = vmul.f32 %v1313, %v497
        %1316 = vst.msk [vmem:[#allocation2 + $0x8] sm:$0xff] %vm563, %v1314
        %1317 = vst.msk [vmem:[#allocation2 + $0x10] sm:$0xff] %vm563, %v1315
        %v1318 = vld [vmem:[#allocation2 + $0x4] sm:$0xff]
        %v1319 = vld [vmem:[#allocation2 + $0xc] sm:$0xff]
        %v1320 = vld [vmem:[#allocation2 + $0x8] sm:$0xff]
        %v1321 = vld [vmem:[#allocation2 + $0x10] sm:$0xff]
        %v1322 = vld [vmem:[#allocation2 + $0x14] sm:$0xff]
        %1325 = vrot.lane.b32.xlu0 %v1320, 32
        %v1326 = vpop.permute.xlu0 %1325
        %1327 = vrot.lane.b32.xlu0 %v1321, 32
        %v1328 = vpop.permute.xlu0 %1327
        %1333 = vrot.lane.b32.xlu0 %v1319, 64
        %v1334 = vpop.permute.xlu0 %1333
        %1335 = vrot.lane.b32.xlu0 %v1322, 64
        %v1336 = vpop.permute.xlu0 %1335
        %v1339 = vsel %vm563, %v1318, %v1326
        %v1340 = vsel %vm563, %v1319, %v1328
        %v1341 = vsel %vm594, %v1339, %v1334
        %v1342 = vsel %vm594, %v1340, %v1336
        %v1343 = vpack.c.bf16 %v1342, %v1341
        %s1344 = scalar_lea.vmem %s4, 96
        %v1345 = vld [vmem:[%s1344] sm:$0xf]
        %v1346 = vld [vmem:[%s1344 + $0x4] sm:$0xf]
        %v1347 = vld [vmem:[%s1344 + $0x8] sm:$0xf]
        %v1348 = vld [vmem:[%s1344 + $0xc] sm:$0xf]
        %v1349 = vld [vmem:[%s1344 + $0x10] sm:$0xf]
        %v1350 = vld [vmem:[%s1344 + $0x14] sm:$0xf]
        %v1351 = vld [vmem:[%s1344 + $0x18] sm:$0xf]
        %v1352 = vld [vmem:[%s1344 + $0x1c] sm:$0xf]
        %v1353 = vld [vmem:[%s1344 + $0x20] sm:$0xf]
        %v1354 = vld [vmem:[%s1344 + $0x24] sm:$0xf]
        %v1355 = vld [vmem:[%s1344 + $0x28] sm:$0xf]
        %v1356 = vld [vmem:[%s1344 + $0x2c] sm:$0xf]
        %v1357 = vld [vmem:[%s5 + $0x2] sm:$0x1]
        %v1358 = vlaneseq
        %v1359 = vshrl.u32 %v1358, 7
        %v1360 = vsub.s32 0, %v1359
        %v1361 = vrot.slane %v1357, %v1360
        %v1374 = vunpack.c.l.b16 %v1345
        %v1375 = vunpack.c.l.b16 %v1346
        %v1376 = vunpack.c.l.b16 %v1347
        %v1377 = vunpack.c.l.b16 %v1348
        %v1378 = vunpack.c.l.b16 %v1349
        %v1379 = vunpack.c.l.b16 %v1350
        %v1380 = vunpack.c.l.b16 %v1351
        %v1381 = vunpack.c.l.b16 %v1352
        %v1382 = vunpack.c.l.b16 %v1353
        %v1383 = vunpack.c.l.b16 %v1354
        %v1384 = vunpack.c.l.b16 %v1355
        %v1385 = vunpack.c.l.b16 %v1356
        %v1386 = vpack.c.b16 %v1375, %v1374
        %v1387 = vpack.c.b16 %v1377, %v1376
        %v1388 = vpack.c.b16 %v1379, %v1378
        %v1389 = vpack.c.b16 %v1381, %v1380
        %v1390 = vpack.c.b16 %v1383, %v1382
        %v1391 = vpack.c.b16 %v1385, %v1384
        %v1399 = vsel %vm651, %v1343, 0
        %1401 = vmatprep.subr.bf16.mxu0 0
        %1402 = vmatpush1.bf16.msra.mxu0 %v1386
        %1403 = vmatprep.subr.bf16.mxu0 0
        %1404 = vmatpush1.bf16.msra.mxu0 %v1387
        %1405 = vmatprep.subr.bf16.mxu0 0
        %1406 = vmatpush1.bf16.msra.mxu0 %v1388
        %1407 = vmatprep.subr.bf16.mxu0 0
        %1408 = vmatpush1.bf16.msra.mxu0 %v1389
        %1409 = vmatprep.subr.bf16.mxu0 0
        %1410 = vmatpush1.bf16.msra.mxu0 %v1390
        %1411 = vmatprep.subr.bf16.mxu0 0
        %1412 = vmatpush1.bf16.msra.mxu0 %v1391
        %1413 = vmatprep.subr.bf16.mxu0 0
        %1414 = vmatpush1.bf16.msra.mxu0 0
        %1415 = vmatprep.subr.bf16.mxu0 0
        %1416 = vmatpush1.bf16.msra.mxu0 0
        %1417 = vmatprep.subr.bf16.mxu0 0
        %1418 = vmatpush1.bf16.msra.mxu0 0
        %1419 = vmatprep.subr.bf16.mxu0 0
        %1420 = vmatpush1.bf16.msra.mxu0 0
        %1421 = vmatprep.subr.bf16.mxu0 0
        %1422 = vmatpush1.bf16.msra.mxu0 0
        %1423 = vmatprep.subr.bf16.mxu0 0
        %1424 = vmatpush1.bf16.msra.mxu0 0
        %1425 = vmatprep.subr.bf16.mxu0 0
        %1426 = vmatpush1.bf16.msra.mxu0 0
        %1427 = vmatprep.subr.bf16.mxu0 0
        %1428 = vmatpush1.bf16.msra.mxu0 0
        %1429 = vmatprep.subr.bf16.mxu0 0
        %1430 = vmatpush1.bf16.msra.mxu0 0
        %1431 = vmatprep.subr.bf16.mxu0 0
        %1432 = vmatpush1.bf16.msra.mxu0 0
        %1433 = vmatprep.mubr.bf16.mxu0 0
        %1434 = vmatmul.mubr.bf16.gmra.mrb[0].mxu0 %v1399
        %v1435 = vpop.f32.mrb[0].mxu0
        %v1436 = vadd.f32 %v1361, %v1435
        %v1437 = vpop.f32.mrb[0].mxu0
        %v1438 = vpop.f32.mrb[0].mxu0
        %v1439 = vadd.f32 %v1361, %v1438
        %v1440 = vpop.f32.mrb[0].mxu0
        %1441 = vdwg.mxu0
        %s1442 = scalar_lea.vmem %s6, 96
        %v1443 = vld [vmem:[%s1442] sm:$0xf]
        %v1444 = vld [vmem:[%s1442 + $0x4] sm:$0xf]
        %v1445 = vld [vmem:[%s1442 + $0x8] sm:$0xf]
        %v1446 = vld [vmem:[%s1442 + $0xc] sm:$0xf]
        %v1447 = vld [vmem:[%s1442 + $0x10] sm:$0xf]
        %v1448 = vld [vmem:[%s1442 + $0x14] sm:$0xf]
        %v1449 = vld [vmem:[%s1442 + $0x18] sm:$0xf]
        %v1450 = vld [vmem:[%s1442 + $0x1c] sm:$0xf]
        %v1451 = vld [vmem:[%s1442 + $0x20] sm:$0xf]
        %v1452 = vld [vmem:[%s1442 + $0x24] sm:$0xf]
        %v1453 = vld [vmem:[%s1442 + $0x28] sm:$0xf]
        %v1454 = vld [vmem:[%s1442 + $0x2c] sm:$0xf]
        %v1455 = vld [vmem:[%s7 + $0x2] sm:$0x1]
        %v1456 = vlaneseq
        %v1457 = vshrl.u32 %v1456, 7
        %v1458 = vsub.s32 0, %v1457
        %v1459 = vrot.slane %v1455, %v1458
        %v1472 = vunpack.c.l.b16 %v1443
        %v1473 = vunpack.c.l.b16 %v1444
        %v1474 = vunpack.c.l.b16 %v1445
        %v1475 = vunpack.c.l.b16 %v1446
        %v1476 = vunpack.c.l.b16 %v1447
        %v1477 = vunpack.c.l.b16 %v1448
        %v1478 = vunpack.c.l.b16 %v1449
        %v1479 = vunpack.c.l.b16 %v1450
        %v1480 = vunpack.c.l.b16 %v1451
        %v1481 = vunpack.c.l.b16 %v1452
        %v1482 = vunpack.c.l.b16 %v1453
        %v1483 = vunpack.c.l.b16 %v1454
        %v1484 = vpack.c.b16 %v1473, %v1472
        %v1485 = vpack.c.b16 %v1475, %v1474
        %v1486 = vpack.c.b16 %v1477, %v1476
        %v1487 = vpack.c.b16 %v1479, %v1478
        %v1488 = vpack.c.b16 %v1481, %v1480
        %v1489 = vpack.c.b16 %v1483, %v1482
        %1496 = vmatprep.subr.bf16.mxu0 0
        %1497 = vmatpush1.bf16.msra.mxu0 %v1484
        %1498 = vmatprep.subr.bf16.mxu0 0
        %1499 = vmatpush1.bf16.msra.mxu0 %v1485
        %1500 = vmatprep.subr.bf16.mxu0 0
        %1501 = vmatpush1.bf16.msra.mxu0 %v1486
        %1502 = vmatprep.subr.bf16.mxu0 0
        %1503 = vmatpush1.bf16.msra.mxu0 %v1487
        %1504 = vmatprep.subr.bf16.mxu0 0
        %1505 = vmatpush1.bf16.msra.mxu0 %v1488
        %1506 = vmatprep.subr.bf16.mxu0 0
        %1507 = vmatpush1.bf16.msra.mxu0 %v1489
        %1508 = vmatprep.subr.bf16.mxu0 0
        %1509 = vmatpush1.bf16.msra.mxu0 0
        %1510 = vmatprep.subr.bf16.mxu0 0
        %1511 = vmatpush1.bf16.msra.mxu0 0
        %1512 = vmatprep.subr.bf16.mxu0 0
        %1513 = vmatpush1.bf16.msra.mxu0 0
        %1514 = vmatprep.subr.bf16.mxu0 0
        %1515 = vmatpush1.bf16.msra.mxu0 0
        %1516 = vmatprep.subr.bf16.mxu0 0
        %1517 = vmatpush1.bf16.msra.mxu0 0
        %1518 = vmatprep.subr.bf16.mxu0 0
        %1519 = vmatpush1.bf16.msra.mxu0 0
        %1520 = vmatprep.subr.bf16.mxu0 0
        %1521 = vmatpush1.bf16.msra.mxu0 0
        %1522 = vmatprep.subr.bf16.mxu0 0
        %1523 = vmatpush1.bf16.msra.mxu0 0
        %1524 = vmatprep.subr.bf16.mxu0 0
        %1525 = vmatpush1.bf16.msra.mxu0 0
        %1526 = vmatprep.subr.bf16.mxu0 0
        %1527 = vmatpush1.bf16.msra.mxu0 0
        %1528 = vmatprep.mubr.bf16.mxu0 0
        %1529 = vmatmul.mubr.bf16.gmra.mrb[0].mxu0 %v1399
        %v1530 = vpop.f32.mrb[0].mxu0
        %v1531 = vadd.f32 %v1459, %v1530
        %v1532 = vpop.f32.mrb[0].mxu0
        %v1533 = vpop.f32.mrb[0].mxu0
        %v1534 = vadd.f32 %v1459, %v1533
        %v1535 = vpop.f32.mrb[0].mxu0
        %1536 = vdwg.mxu0
        %v1537 = vtanh.pop %v1436
        %v1538 = vtanh.pop %v1439
        %v1539 = vxor.u32 %v1531, 2147483648
        %v1540 = vxor.u32 %v1534, 2147483648
        %v1541 = vmul.f32 %v1539, 1.442695
        %v1542 = vpow.pop %v1541
        %v1543 = vmul.f32 %v1540, 1.442695
        %v1544 = vpow.pop %v1543
        %v1545 = vadd.f32 %v1542, 1.0
        %v1546 = vadd.f32 %v1544, 1.0
        %v1547 = vrcp.pop %v1545
        %v1548 = vmul.f32 1.0, %v1547
        %v1549 = vrcp.pop %v1546
        %v1550 = vmul.f32 1.0, %v1549
        %v1551 = vmul.f32 %v1537, %v1548
        %v1552 = vmul.f32 %v1538, %v1550
        %v1553 = vpack.c.bf16 %v1552, %v1551
        %v1554 = vld [vmem:[#allocation3] sm:$0xff]
        %v1555 = vld [vmem:[#allocation3 + $0x8] sm:$0xff]
        %s1556 = scalar_lea.vmem %s10, 32
        %v1557 = vld [vmem:[%s1556] sm:$0xf]
        %v1558 = vld [vmem:[%s1556 + $0x4] sm:$0xf]
        %v1559 = vld [vmem:[%s1556 + $0x8] sm:$0xf]
        %v1560 = vld [vmem:[%s1556 + $0xc] sm:$0xf]
        %v1565 = vunpack.c.l.b16 %v1557
        %v1566 = vunpack.c.l.b16 %v1558
        %v1567 = vunpack.c.l.b16 %v1559
        %v1568 = vunpack.c.l.b16 %v1560
        %v1569 = vpack.c.b16 %v1566, %v1565
        %v1570 = vpack.c.b16 %v1568, %v1567
        %v1574 = vsel %vm563, %v1553, 0
        %1576 = vmatprep.subr.bf16.mxu0 0
        %1577 = vmatpush1.bf16.msra.mxu0 %v1569
        %1578 = vmatprep.subr.bf16.mxu0 0
        %1579 = vmatpush1.bf16.msra.mxu0 %v1570
        %1580 = vmatprep.subr.bf16.mxu0 0
        %1581 = vmatpush1.bf16.msra.mxu0 0
        %1582 = vmatprep.subr.bf16.mxu0 0
        %1583 = vmatpush1.bf16.msra.mxu0 0
        %1584 = vmatprep.subr.bf16.mxu0 0
        %1585 = vmatpush1.bf16.msra.mxu0 0
        %1586 = vmatprep.subr.bf16.mxu0 0
        %1587 = vmatpush1.bf16.msra.mxu0 0
        %1588 = vmatprep.subr.bf16.mxu0 0
        %1589 = vmatpush1.bf16.msra.mxu0 0
        %1590 = vmatprep.subr.bf16.mxu0 0
        %1591 = vmatpush1.bf16.msra.mxu0 0
        %1592 = vmatprep.subr.bf16.mxu0 0
        %1593 = vmatpush1.bf16.msra.mxu0 0
        %1594 = vmatprep.subr.bf16.mxu0 0
        %1595 = vmatpush1.bf16.msra.mxu0 0
        %1596 = vmatprep.subr.bf16.mxu0 0
        %1597 = vmatpush1.bf16.msra.mxu0 0
        %1598 = vmatprep.subr.bf16.mxu0 0
        %1599 = vmatpush1.bf16.msra.mxu0 0
        %1600 = vmatprep.subr.bf16.mxu0 0
        %1601 = vmatpush1.bf16.msra.mxu0 0
        %1602 = vmatprep.subr.bf16.mxu0 0
        %1603 = vmatpush1.bf16.msra.mxu0 0
        %1604 = vmatprep.subr.bf16.mxu0 0
        %1605 = vmatpush1.bf16.msra.mxu0 0
        %1606 = vmatprep.subr.bf16.mxu0 0
        %1607 = vmatpush1.bf16.msra.mxu0 0
        %1608 = vmatprep.mubr.bf16.mxu0 0
        %1609 = vmatmul.mubr.bf16.gmra.mrb[0].mxu0 %v1574
        %v1610 = vpop.f32.mrb[0].mxu0
        %v1611 = vadd.f32 0.0, %v1610
        %v1612 = vpop.f32.mrb[0].mxu0
        %v1613 = vpop.f32.mrb[0].mxu0
        %v1614 = vadd.f32 0.0, %v1613
        %v1615 = vpop.f32.mrb[0].mxu0
        %1616 = vdwg.mxu0
        %v1617 = vadd.f32 %v1554, %v1611
        %v1618 = vadd.f32 %v1555, %v1614
        %1619 = vst.msk [vmem:[#allocation3] sm:$0xff] %vm563, %v1617
        %1620 = vst.msk [vmem:[#allocation3 + $0x8] sm:$0xff] %vm563, %v1618
        %s1621 = scalar_lea.vmem %s8, 32
        %v1622 = vld [vmem:[%s1621] sm:$0xf]
        %v1623 = vld [vmem:[%s1621 + $0x4] sm:$0xf]
        %v1624 = vld [vmem:[%s1621 + $0x8] sm:$0xf]
        %v1625 = vld [vmem:[%s1621 + $0xc] sm:$0xf]
        %v1626 = vld [vmem:[%s9 + $0x2] sm:$0x1]
        %v1627 = vlaneseq
        %v1628 = vshrl.u32 %v1627, 7
        %v1629 = vsub.s32 0, %v1628
        %v1630 = vrot.slane %v1626, %v1629
        %v1635 = vunpack.c.l.b16 %v1622
        %v1636 = vunpack.c.l.b16 %v1623
        %v1637 = vunpack.c.l.b16 %v1624
        %v1638 = vunpack.c.l.b16 %v1625
        %v1639 = vpack.c.b16 %v1636, %v1635
        %v1640 = vpack.c.b16 %v1638, %v1637
        %1643 = vmatprep.subr.bf16.mxu0 0
        %1644 = vmatpush1.bf16.msra.mxu0 %v1639
        %1645 = vmatprep.subr.bf16.mxu0 0
        %1646 = vmatpush1.bf16.msra.mxu0 %v1640
        %1647 = vmatprep.subr.bf16.mxu0 0
        %1648 = vmatpush1.bf16.msra.mxu0 0
        %1649 = vmatprep.subr.bf16.mxu0 0
        %1650 = vmatpush1.bf16.msra.mxu0 0
        %1651 = vmatprep.subr.bf16.mxu0 0
        %1652 = vmatpush1.bf16.msra.mxu0 0
        %1653 = vmatprep.subr.bf16.mxu0 0
        %1654 = vmatpush1.bf16.msra.mxu0 0
        %1655 = vmatprep.subr.bf16.mxu0 0
        %1656 = vmatpush1.bf16.msra.mxu0 0
        %1657 = vmatprep.subr.bf16.mxu0 0
        %1658 = vmatpush1.bf16.msra.mxu0 0
        %1659 = vmatprep.subr.bf16.mxu0 0
        %1660 = vmatpush1.bf16.msra.mxu0 0
        %1661 = vmatprep.subr.bf16.mxu0 0
        %1662 = vmatpush1.bf16.msra.mxu0 0
        %1663 = vmatprep.subr.bf16.mxu0 0
        %1664 = vmatpush1.bf16.msra.mxu0 0
        %1665 = vmatprep.subr.bf16.mxu0 0
        %1666 = vmatpush1.bf16.msra.mxu0 0
        %1667 = vmatprep.subr.bf16.mxu0 0
        %1668 = vmatpush1.bf16.msra.mxu0 0
        %1669 = vmatprep.subr.bf16.mxu0 0
        %1670 = vmatpush1.bf16.msra.mxu0 0
        %1671 = vmatprep.subr.bf16.mxu0 0
        %1672 = vmatpush1.bf16.msra.mxu0 0
        %1673 = vmatprep.subr.bf16.mxu0 0
        %1674 = vmatpush1.bf16.msra.mxu0 0
        %1675 = vmatprep.mubr.bf16.mxu0 0
        %1676 = vmatmul.mubr.bf16.gmra.mrb[0].mxu0 %v1574
        %v1677 = vpop.f32.mrb[0].mxu0
        %v1678 = vadd.f32 %v1630, %v1677
        %v1679 = vpop.f32.mrb[0].mxu0
        %v1680 = vpop.f32.mrb[0].mxu0
        %v1681 = vadd.f32 %v1630, %v1680
        %v1682 = vpop.f32.mrb[0].mxu0
        %1683 = vdwg.mxu0
        %v1684 = vld [vmem:[#allocation2 + $0x8] sm:$0xff]
        %v1685 = vld [vmem:[#allocation2 + $0x10] sm:$0xff]
        %v1686 = vadd.f32 %v1684, %v1678
        %v1687 = vadd.f32 %v1685, %v1681
        %v1688 = vmul.f32 %v1686, %v492
        %v1689 = vmul.f32 %v1687, %v497
        %1690 = vst.msk [vmem:[#allocation2 + $0x8] sm:$0xff] %vm563, %v1688
        %1691 = vst.msk [vmem:[#allocation2 + $0x10] sm:$0xff] %vm563, %v1689
        %v1692 = vld [vmem:[#allocation2] sm:$0xff]
        %v1693 = vld [vmem:[#allocation2 + $0x8] sm:$0xff]
        %v1694 = vld [vmem:[#allocation2 + $0x10] sm:$0xff]
        %v1695 = vld [vmem:[#allocation2 + $0x18] sm:$0xff]
        %1698 = vrot.lane.b32.xlu0 %v1693, 32
        %v1699 = vpop.permute.xlu0 %1698
        %1700 = vrot.lane.b32.xlu0 %v1694, 32
        %v1701 = vpop.permute.xlu0 %1700
        %1705 = vrot.lane.b32.xlu0 %v1694, 64
        %v1706 = vpop.permute.xlu0 %1705
        %1707 = vrot.lane.b32.xlu0 %v1695, 64
        %v1708 = vpop.permute.xlu0 %1707
        %v1711 = vsel %vm563, %v1692, %v1699
        %v1712 = vsel %vm563, %v1693, %v1701
        %v1713 = vsel %vm594, %v1711, %v1706
        %v1714 = vsel %vm594, %v1712, %v1708
        %v1715 = vpack.c.bf16 %v1714, %v1713
        %s1716 = scalar_lea.vmem %s4, 144
        %v1717 = vld [vmem:[%s1716] sm:$0xf]
        %v1718 = vld [vmem:[%s1716 + $0x4] sm:$0xf]
        %v1719 = vld [vmem:[%s1716 + $0x8] sm:$0xf]
        %v1720 = vld [vmem:[%s1716 + $0xc] sm:$0xf]
        %v1721 = vld [vmem:[%s1716 + $0x10] sm:$0xf]
        %v1722 = vld [vmem:[%s1716 + $0x14] sm:$0xf]
        %v1723 = vld [vmem:[%s1716 + $0x18] sm:$0xf]
        %v1724 = vld [vmem:[%s1716 + $0x1c] sm:$0xf]
        %v1725 = vld [vmem:[%s1716 + $0x20] sm:$0xf]
        %v1726 = vld [vmem:[%s1716 + $0x24] sm:$0xf]
        %v1727 = vld [vmem:[%s1716 + $0x28] sm:$0xf]
        %v1728 = vld [vmem:[%s1716 + $0x2c] sm:$0xf]
        %v1729 = vld [vmem:[%s5 + $0x3] sm:$0x1]
        %v1730 = vlaneseq
        %v1731 = vshrl.u32 %v1730, 7
        %v1732 = vsub.s32 0, %v1731
        %v1733 = vrot.slane %v1729, %v1732
        %v1746 = vunpack.c.l.b16 %v1717
        %v1747 = vunpack.c.l.b16 %v1718
        %v1748 = vunpack.c.l.b16 %v1719
        %v1749 = vunpack.c.l.b16 %v1720
        %v1750 = vunpack.c.l.b16 %v1721
        %v1751 = vunpack.c.l.b16 %v1722
        %v1752 = vunpack.c.l.b16 %v1723
        %v1753 = vunpack.c.l.b16 %v1724
        %v1754 = vunpack.c.l.b16 %v1725
        %v1755 = vunpack.c.l.b16 %v1726
        %v1756 = vunpack.c.l.b16 %v1727
        %v1757 = vunpack.c.l.b16 %v1728
        %v1758 = vpack.c.b16 %v1747, %v1746
        %v1759 = vpack.c.b16 %v1749, %v1748
        %v1760 = vpack.c.b16 %v1751, %v1750
        %v1761 = vpack.c.b16 %v1753, %v1752
        %v1762 = vpack.c.b16 %v1755, %v1754
        %v1763 = vpack.c.b16 %v1757, %v1756
        %v1771 = vsel %vm651, %v1715, 0
        %1773 = vmatprep.subr.bf16.mxu0 0
        %1774 = vmatpush1.bf16.msra.mxu0 %v1758
        %1775 = vmatprep.subr.bf16.mxu0 0
        %1776 = vmatpush1.bf16.msra.mxu0 %v1759
        %1777 = vmatprep.subr.bf16.mxu0 0
        %1778 = vmatpush1.bf16.msra.mxu0 %v1760
        %1779 = vmatprep.subr.bf16.mxu0 0
        %1780 = vmatpush1.bf16.msra.mxu0 %v1761
        %1781 = vmatprep.subr.bf16.mxu0 0
        %1782 = vmatpush1.bf16.msra.mxu0 %v1762
        %1783 = vmatprep.subr.bf16.mxu0 0
        %1784 = vmatpush1.bf16.msra.mxu0 %v1763
        %1785 = vmatprep.subr.bf16.mxu0 0
        %1786 = vmatpush1.bf16.msra.mxu0 0
        %1787 = vmatprep.subr.bf16.mxu0 0
        %1788 = vmatpush1.bf16.msra.mxu0 0
        %1789 = vmatprep.subr.bf16.mxu0 0
        %1790 = vmatpush1.bf16.msra.mxu0 0
        %1791 = vmatprep.subr.bf16.mxu0 0
        %1792 = vmatpush1.bf16.msra.mxu0 0
        %1793 = vmatprep.subr.bf16.mxu0 0
        %1794 = vmatpush1.bf16.msra.mxu0 0
        %1795 = vmatprep.subr.bf16.mxu0 0
        %1796 = vmatpush1.bf16.msra.mxu0 0
        %1797 = vmatprep.subr.bf16.mxu0 0
        %1798 = vmatpush1.bf16.msra.mxu0 0
        %1799 = vmatprep.subr.bf16.mxu0 0
        %1800 = vmatpush1.bf16.msra.mxu0 0
        %1801 = vmatprep.subr.bf16.mxu0 0
        %1802 = vmatpush1.bf16.msra.mxu0 0
        %1803 = vmatprep.subr.bf16.mxu0 0
        %1804 = vmatpush1.bf16.msra.mxu0 0
        %1805 = vmatprep.mubr.bf16.mxu0 0
        %1806 = vmatmul.mubr.bf16.gmra.mrb[0].mxu0 %v1771
        %v1807 = vpop.f32.mrb[0].mxu0
        %v1808 = vadd.f32 %v1733, %v1807
        %v1809 = vpop.f32.mrb[0].mxu0
        %v1810 = vpop.f32.mrb[0].mxu0
        %v1811 = vadd.f32 %v1733, %v1810
        %v1812 = vpop.f32.mrb[0].mxu0
        %1813 = vdwg.mxu0
        %s1814 = scalar_lea.vmem %s6, 144
        %v1815 = vld [vmem:[%s1814] sm:$0xf]
        %v1816 = vld [vmem:[%s1814 + $0x4] sm:$0xf]
        %v1817 = vld [vmem:[%s1814 + $0x8] sm:$0xf]
        %v1818 = vld [vmem:[%s1814 + $0xc] sm:$0xf]
        %v1819 = vld [vmem:[%s1814 + $0x10] sm:$0xf]
        %v1820 = vld [vmem:[%s1814 + $0x14] sm:$0xf]
        %v1821 = vld [vmem:[%s1814 + $0x18] sm:$0xf]
        %v1822 = vld [vmem:[%s1814 + $0x1c] sm:$0xf]
        %v1823 = vld [vmem:[%s1814 + $0x20] sm:$0xf]
        %v1824 = vld [vmem:[%s1814 + $0x24] sm:$0xf]
        %v1825 = vld [vmem:[%s1814 + $0x28] sm:$0xf]
        %v1826 = vld [vmem:[%s1814 + $0x2c] sm:$0xf]
        %v1827 = vld [vmem:[%s7 + $0x3] sm:$0x1]
        %v1828 = vlaneseq
        %v1829 = vshrl.u32 %v1828, 7
        %v1830 = vsub.s32 0, %v1829
        %v1831 = vrot.slane %v1827, %v1830
        %v1844 = vunpack.c.l.b16 %v1815
        %v1845 = vunpack.c.l.b16 %v1816
        %v1846 = vunpack.c.l.b16 %v1817
        %v1847 = vunpack.c.l.b16 %v1818
        %v1848 = vunpack.c.l.b16 %v1819
        %v1849 = vunpack.c.l.b16 %v1820
        %v1850 = vunpack.c.l.b16 %v1821
        %v1851 = vunpack.c.l.b16 %v1822
        %v1852 = vunpack.c.l.b16 %v1823
        %v1853 = vunpack.c.l.b16 %v1824
        %v1854 = vunpack.c.l.b16 %v1825
        %v1855 = vunpack.c.l.b16 %v1826
        %v1856 = vpack.c.b16 %v1845, %v1844
        %v1857 = vpack.c.b16 %v1847, %v1846
        %v1858 = vpack.c.b16 %v1849, %v1848
        %v1859 = vpack.c.b16 %v1851, %v1850
        %v1860 = vpack.c.b16 %v1853, %v1852
        %v1861 = vpack.c.b16 %v1855, %v1854
        %1868 = vmatprep.subr.bf16.mxu0 0
        %1869 = vmatpush1.bf16.msra.mxu0 %v1856
        %1870 = vmatprep.subr.bf16.mxu0 0
        %1871 = vmatpush1.bf16.msra.mxu0 %v1857
        %1872 = vmatprep.subr.bf16.mxu0 0
        %1873 = vmatpush1.bf16.msra.mxu0 %v1858
        %1874 = vmatprep.subr.bf16.mxu0 0
        %1875 = vmatpush1.bf16.msra.mxu0 %v1859
        %1876 = vmatprep.subr.bf16.mxu0 0
        %1877 = vmatpush1.bf16.msra.mxu0 %v1860
        %1878 = vmatprep.subr.bf16.mxu0 0
        %1879 = vmatpush1.bf16.msra.mxu0 %v1861
        %1880 = vmatprep.subr.bf16.mxu0 0
        %1881 = vmatpush1.bf16.msra.mxu0 0
        %1882 = vmatprep.subr.bf16.mxu0 0
        %1883 = vmatpush1.bf16.msra.mxu0 0
        %1884 = vmatprep.subr.bf16.mxu0 0
        %1885 = vmatpush1.bf16.msra.mxu0 0
        %1886 = vmatprep.subr.bf16.mxu0 0
        %1887 = vmatpush1.bf16.msra.mxu0 0
        %1888 = vmatprep.subr.bf16.mxu0 0
        %1889 = vmatpush1.bf16.msra.mxu0 0
        %1890 = vmatprep.subr.bf16.mxu0 0
        %1891 = vmatpush1.bf16.msra.mxu0 0
        %1892 = vmatprep.subr.bf16.mxu0 0
        %1893 = vmatpush1.bf16.msra.mxu0 0
        %1894 = vmatprep.subr.bf16.mxu0 0
        %1895 = vmatpush1.bf16.msra.mxu0 0
        %1896 = vmatprep.subr.bf16.mxu0 0
        %1897 = vmatpush1.bf16.msra.mxu0 0
        %1898 = vmatprep.subr.bf16.mxu0 0
        %1899 = vmatpush1.bf16.msra.mxu0 0
        %1900 = vmatprep.mubr.bf16.mxu0 0
        %1901 = vmatmul.mubr.bf16.gmra.mrb[0].mxu0 %v1771
        %v1902 = vpop.f32.mrb[0].mxu0
        %v1903 = vadd.f32 %v1831, %v1902
        %v1904 = vpop.f32.mrb[0].mxu0
        %v1905 = vpop.f32.mrb[0].mxu0
        %v1906 = vadd.f32 %v1831, %v1905
        %v1907 = vpop.f32.mrb[0].mxu0
        %1908 = vdwg.mxu0
        %v1909 = vtanh.pop %v1808
        %v1910 = vtanh.pop %v1811
        %v1911 = vxor.u32 %v1903, 2147483648
        %v1912 = vxor.u32 %v1906, 2147483648
        %v1913 = vmul.f32 %v1911, 1.442695
        %v1914 = vpow.pop %v1913
        %v1915 = vmul.f32 %v1912, 1.442695
        %v1916 = vpow.pop %v1915
        %v1917 = vadd.f32 %v1914, 1.0
        %v1918 = vadd.f32 %v1916, 1.0
        %v1919 = vrcp.pop %v1917
        %v1920 = vmul.f32 1.0, %v1919
        %v1921 = vrcp.pop %v1918
        %v1922 = vmul.f32 1.0, %v1921
        %v1923 = vmul.f32 %v1909, %v1920
        %v1924 = vmul.f32 %v1910, %v1922
        %v1925 = vpack.c.bf16 %v1924, %v1923
        %s1926 = scalar_lea.vmem %s10, 48
        %v1927 = vld [vmem:[%s1926] sm:$0xf]
        %v1928 = vld [vmem:[%s1926 + $0x4] sm:$0xf]
        %v1929 = vld [vmem:[%s1926 + $0x8] sm:$0xf]
        %v1930 = vld [vmem:[%s1926 + $0xc] sm:$0xf]
        %v1931 = vld [vmem:[#allocation3] sm:$0xff]
        %v1932 = vld [vmem:[#allocation3 + $0x8] sm:$0xff]
        %v1937 = vunpack.c.l.b16 %v1927
        %v1938 = vunpack.c.l.b16 %v1928
        %v1939 = vunpack.c.l.b16 %v1929
        %v1940 = vunpack.c.l.b16 %v1930
        %v1941 = vpack.c.b16 %v1938, %v1937
        %v1942 = vpack.c.b16 %v1940, %v1939
        %v1946 = vsel %vm563, %v1925, 0
        %1948 = vmatprep.subr.bf16.mxu0 0
        %1949 = vmatpush1.bf16.msra.mxu0 %v1941
        %1950 = vmatprep.subr.bf16.mxu0 0
        %1951 = vmatpush1.bf16.msra.mxu0 %v1942
        %1952 = vmatprep.subr.bf16.mxu0 0
        %1953 = vmatpush1.bf16.msra.mxu0 0
        %1954 = vmatprep.subr.bf16.mxu0 0
        %1955 = vmatpush1.bf16.msra.mxu0 0
        %1956 = vmatprep.subr.bf16.mxu0 0
        %1957 = vmatpush1.bf16.msra.mxu0 0
        %1958 = vmatprep.subr.bf16.mxu0 0
        %1959 = vmatpush1.bf16.msra.mxu0 0
        %1960 = vmatprep.subr.bf16.mxu0 0
        %1961 = vmatpush1.bf16.msra.mxu0 0
        %1962 = vmatprep.subr.bf16.mxu0 0
        %1963 = vmatpush1.bf16.msra.mxu0 0
        %1964 = vmatprep.subr.bf16.mxu0 0
        %1965 = vmatpush1.bf16.msra.mxu0 0
        %1966 = vmatprep.subr.bf16.mxu0 0
        %1967 = vmatpush1.bf16.msra.mxu0 0
        %1968 = vmatprep.subr.bf16.mxu0 0
        %1969 = vmatpush1.bf16.msra.mxu0 0
        %1970 = vmatprep.subr.bf16.mxu0 0
        %1971 = vmatpush1.bf16.msra.mxu0 0
        %1972 = vmatprep.subr.bf16.mxu0 0
        %1973 = vmatpush1.bf16.msra.mxu0 0
        %1974 = vmatprep.subr.bf16.mxu0 0
        %1975 = vmatpush1.bf16.msra.mxu0 0
        %1976 = vmatprep.subr.bf16.mxu0 0
        %1977 = vmatpush1.bf16.msra.mxu0 0
        %1978 = vmatprep.subr.bf16.mxu0 0
        %1979 = vmatpush1.bf16.msra.mxu0 0
        %1980 = vmatprep.mubr.bf16.mxu0 0
        %1981 = vmatmul.mubr.bf16.gmra.mrb[0].mxu0 %v1946
        %v1982 = vpop.f32.mrb[0].mxu0
        %v1983 = vadd.f32 0.0, %v1982
        %v1984 = vpop.f32.mrb[0].mxu0
        %v1985 = vpop.f32.mrb[0].mxu0
        %v1986 = vadd.f32 0.0, %v1985
        %v1987 = vpop.f32.mrb[0].mxu0
        %1988 = vdwg.mxu0
        %v1989 = vadd.f32 %v1931, %v1983
        %v1990 = vadd.f32 %v1932, %v1986
        %1991 = vst.msk [vmem:[#allocation3] sm:$0xff] %vm563, %v1989
        %1992 = vst.msk [vmem:[#allocation3 + $0x8] sm:$0xff] %vm563, %v1990
        %v1993 = vld [vmem:[#allocation3] sm:$0xff]
        %v1994 = vld [vmem:[#allocation3 + $0x8] sm:$0xff]
        %v1995 = vld [vmem:[%s11] sm:$0x1]
        %v1997 = vlaneseq
        %v1998 = vshrl.u32 %v1997, 7
        %v1999 = vsub.s32 0, %v1998
        %v2000 = vrot.slane %v1995, %v1999
        %v2002 = vadd.f32 %v1993, %v2000
        %v2003 = vadd.f32 %v1994, %v2000
        %v2004 = vmul.f32 %v2002, %v492
        %v2005 = vmul.f32 %v2003, %v497
        %v2006 = vpack.c.bf16 %v2005, %v2004
        %v2007 = vld [vmem:[%s12] sm:$0xf]
        %v2008 = vld [vmem:[%s12 + $0x4] sm:$0xf]
        %v2009 = vld [vmem:[%s12 + $0x8] sm:$0xf]
        %v2010 = vld [vmem:[%s12 + $0xc] sm:$0xf]
        %v2011 = vld [vmem:[%s13] sm:$0x1]
        %v2013 = vlaneseq
        %v2014 = vshrl.u32 %v2013, 7
        %v2015 = vsub.s32 0, %v2014
        %v2016 = vrot.slane %v2011, %v2015
        %v2022 = vunpack.c.l.b16 %v2007
        %v2023 = vunpack.c.l.b16 %v2008
        %v2024 = vunpack.c.l.b16 %v2009
        %v2025 = vunpack.c.l.b16 %v2010
        %v2026 = vpack.c.b16 %v2023, %v2022
        %v2027 = vpack.c.b16 %v2025, %v2024
        %v2031 = vsel %vm563, %v2006, 0
        %2033 = vmatprep.subr.bf16.mxu0 0
        %2034 = vmatpush1.bf16.msra.mxu0 %v2026
        %2035 = vmatprep.subr.bf16.mxu0 0
        %2036 = vmatpush1.bf16.msra.mxu0 %v2027
        %2037 = vmatprep.subr.bf16.mxu0 0
        %2038 = vmatpush1.bf16.msra.mxu0 0
        %2039 = vmatprep.subr.bf16.mxu0 0
        %2040 = vmatpush1.bf16.msra.mxu0 0
        %2041 = vmatprep.subr.bf16.mxu0 0
        %2042 = vmatpush1.bf16.msra.mxu0 0
        %2043 = vmatprep.subr.bf16.mxu0 0
        %2044 = vmatpush1.bf16.msra.mxu0 0
        %2045 = vmatprep.subr.bf16.mxu0 0
        %2046 = vmatpush1.bf16.msra.mxu0 0
        %2047 = vmatprep.subr.bf16.mxu0 0
        %2048 = vmatpush1.bf16.msra.mxu0 0
        %2049 = vmatprep.subr.bf16.mxu0 0
        %2050 = vmatpush1.bf16.msra.mxu0 0
        %2051 = vmatprep.subr.bf16.mxu0 0
        %2052 = vmatpush1.bf16.msra.mxu0 0
        %2053 = vmatprep.subr.bf16.mxu0 0
        %2054 = vmatpush1.bf16.msra.mxu0 0
        %2055 = vmatprep.subr.bf16.mxu0 0
        %2056 = vmatpush1.bf16.msra.mxu0 0
        %2057 = vmatprep.subr.bf16.mxu0 0
        %2058 = vmatpush1.bf16.msra.mxu0 0
        %2059 = vmatprep.subr.bf16.mxu0 0
        %2060 = vmatpush1.bf16.msra.mxu0 0
        %2061 = vmatprep.subr.bf16.mxu0 0
        %2062 = vmatpush1.bf16.msra.mxu0 0
        %2063 = vmatprep.subr.bf16.mxu0 0
        %2064 = vmatpush1.bf16.msra.mxu0 0
        %2065 = vmatprep.mubr.bf16.mxu0 0
        %2066 = vmatmul.mubr.bf16.gmra.mrb[0].mxu0 %v2031
        %v2067 = vpop.f32.mrb[0].mxu0
        %v2068 = vadd.f32 %v2016, %v2067
        %v2069 = vpop.f32.mrb[0].mxu0
        %v2070 = vpop.f32.mrb[0].mxu0
        %v2071 = vadd.f32 %v2016, %v2070
        %v2072 = vpop.f32.mrb[0].mxu0
        %2073 = vdwg.mxu0
        %v2074 = vmul.f32 %v2068, %v492
        %v2075 = vmul.f32 %v2071, %v497
        %v2076 = vpack.c.bf16 %v2075, %v2074
        %v2078 = vunpack.c.l.b16 %v2076
        %v2079 = vunpack.c.h.b16 %v2076
        %v2080 = vpack.c.b16 %v2078, %v2078
        %v2081 = vpack.c.b16 %v2079, %v2079
        %2084 = vst [vmem:[%s475] sm:$0xf] %v2080
        %2085 = vst [vmem:[%s475 + $0x4] sm:$0xf] %v2081
        %s2086 = sand.u32 %s340, 1
        %s2087 = scalar_lea.sflag [#allocation5], %s2086
        %s2088 = sand.u32 %s340, 1
        %s2089 = smul.addr %s2088, 8
        %s2090 = scalar_lea.vmem [#allocation4], %s2089
        // Predicated region
        $region77: #{tpu_custom_call.1} parent=75 // pred_check
          %p2091 = pneg %p350
        $region78: #{tpu_custom_call.1} parent=75 // pred_check_branch
          %2093 = sbr.rel (%p2091) target = $region80
        $region79: #{tpu_custom_call.1} parent=75 // pred_region
          %s2095 = ssub.s32 128, 128
          %2096 = vsyncadd %s2087, %s2095
          %s2097 = smul.addr %s28, 2
          %s2098 = smul.addr %s2097, 64
          %s2099 = scalar_lea.hbm %s14, %s2098
          %s2100 = sshll.u32 %s2090, 4
          %s2101 = int_to_ptr.vmem [resolvable:$true] %s2100
          %2106 = dma.vmem_to_hbm [thread:$0]  %s2101, 128, %s2099, %s2087, 64, 64, 4
        $region80: #{tpu_custom_call.1} parent=75 // pred_fallthru
          _
      $region76: #{tpu_custom_call.1} parent=5 // pred_fallthru
        _
      %p2107 = scmp.le.s32.totalorder 2, %s23
      // Predicated region
      $region81: #{tpu_custom_call.1} parent=5 // pred_check
        %p2108 = pneg %p2107
      $region82: #{tpu_custom_call.1} parent=5 // pred_check_branch
        %2110 = sbr.rel (%p2108) target = $region84
      $region83: #{tpu_custom_call.1} parent=5 // pred_region
        %s2111 = ssub.s32 %s23, 2
        // Predicated region
        $region85: #{tpu_custom_call.1} parent=83 // pred_check
          %p2112 = pneg %p356
        $region86: #{tpu_custom_call.1} parent=83 // pred_check_branch
          %2114 = sbr.rel (%p2112) target = $region88
        $region87: #{tpu_custom_call.1} parent=83 // pred_region
          %s2115 = sand.u32 %s341, 1
          %s2116 = scalar_lea.sflag [#allocation5], %s2115
          %s2117 = sand.u32 %s341, 1
          %s2118 = smul.addr %s2117, 8
          %s2119 = scalar_lea.vmem [#allocation4], %s2118
          %2120 = dma.done %s2116, 128
        $region88: #{tpu_custom_call.1} parent=83 // pred_fallthru
          _
      $region84: #{tpu_custom_call.1} parent=5 // pred_fallthru
        _
    $region6: #{tpu_custom_call.1} parent=1 // loop_footer
      %s27 = sadd.s32 1, %s23
    $region7: #{tpu_custom_call.1} parent=1 // loop_footer_branch
      %22 = sbr.rel target = $region3
    $region8: #{tpu_custom_call.1} parent=1 // loop_exit
      _
    %2121 = vsyncpa [#allocation5], 1
    %s2122 = scalar_lea.sflag [#allocation5], 1
    %2123 = vsyncpa %s2122, 1

</llo_original>
